<compile_context>
chip_gen: v7x
topology: tpu7x:2x2x1
jax: 0.10.0
libtpu: 0.0.40
codegen_flags: <defaults>
</compile_context>

<pallas_src>
import jax
import jax.numpy as jnp
import numpy as np
from jax.experimental import pallas as pl
from jax.experimental.pallas import tpu as pltpu


# --------------------------------------------------------------------------------------
# Single fused kernel: GCN (norm-adjacency conv, leaky_relu, soft-weighted channel sum)
#                      -> packed bidirectional GRU -> BatchNorm1d(num_f) (batch stats).
# --------------------------------------------------------------------------------------
def _fused_kernel(scal_ref, xt_ref, h_ref, gw_ref, o_ref):
    B, T, N = xt_ref.shape            # T == num_f (GRU sequence length)
    C = h_ref.shape[1]
    G = gw_ref.shape[1]               # 6 * hidden
    Hh = G // 6

    # ---- packed GRU params: one slab, static row slices (zero-cost ref views) --------
    wi = gw_ref[0:N, :]                                   # (N, 6H)   input proj
    wh = gw_ref[N:N + 2 * Hh, :]                          # (2H, 6H)  block-diag hidden proj
    bi = gw_ref[N + 2 * Hh:N + 2 * Hh + 1, :]             # (1, 6H)
    bh = gw_ref[N + 2 * Hh + 1:N + 2 * Hh + 2, :]         # (1, 6H)

    w_scale = scal_ref[C]                                 # self.weight[0, 0]

    # ------------------ GCN: sum_c soft[c] * leaky_relu(w * D^-1/2 H_c D^-1/2 X) -------
    Xt = xt_ref[...]                                      # (B, T, N)  (per1 already done)

    rows = jax.lax.broadcasted_iota(jnp.int32, (1, N, N), 1)
    cols = jax.lax.broadcasted_iota(jnp.int32, (1, N, N), 2)
    eye_mask = rows == cols                               # built once

    acc = jnp.zeros((B, T, N), jnp.float32)
    for c in range(C):                                    # C is tiny: static unroll
        Hm = h_ref[:, c]                                  # (B, N, N)
        Hm = jnp.where(eye_mask, jnp.float32(1.0), Hm)    # H*(I==0) + I  (diag := 1)
        deg = jnp.sum(Hm, axis=-1)                        # (B, N)
        dinv = jax.lax.rsqrt(deg)[:, None, :]             # (B, 1, N)
        # out[b,f,n] = dinv[n] * w * sum_m H[b,n,m] * dinv[m] * Xt[b,f,m]
        agg = jnp.einsum('bfm,bnm->bfn', Xt * dinv, Hm,
                         preferred_element_type=jnp.float32)
        out = agg * (dinv * w_scale)                      # fold scalar weight into dinv
        out = jnp.where(out >= 0.0, out, 0.01 * out)      # F.leaky_relu, slope 0.01
        acc = acc + out * scal_ref[c]                     # soft[c] (post-relu, not folded)

    # ------------------ GRU: one merged input projection for both directions ----------
    x2d = acc.reshape(B * T, N)
    gi3 = (jnp.dot(x2d, wi, preferred_element_type=jnp.float32) + bi).reshape(B, T, G)

    wh_v = wh[...]                                        # hoisted loads (once)
    bh_v = bh[...]

    # Recurrence: fwd + bwd share one matmul / one gate pass per step.
    # Column layout everywhere: [r_f r_b | z_f z_b | n_f n_b]; h_cat = [h_f | h_b].
    h_cat = jnp.zeros((B, 2 * Hh), jnp.float32)
    outs = []
    for t in range(T):                                    # static unroll (T small, serial)
        gf = gi3[:, t]                                    # fwd direction reads time t
        gb = gi3[:, T - 1 - t]                            # bwd direction reads time T-1-t
        gi_t = jnp.concatenate(
            [gf[:, 0:Hh],           gb[:, Hh:2 * Hh],
             gf[:, 2 * Hh:3 * Hh],  gb[:, 3 * Hh:4 * Hh],
             gf[:, 4 * Hh:5 * Hh],  gb[:, 5 * Hh:6 * Hh]], axis=-1)   # (B, 6H)
        gh = jnp.dot(h_cat, wh_v, preferred_element_type=jnp.float32) + bh_v
        rz = jax.nn.sigmoid(gi_t[:, :4 * Hh] + gh[:, :4 * Hh])        # (B, 4H)
        r = rz[:, :2 * Hh]
        zg = rz[:, 2 * Hh:]
        n = jnp.tanh(gi_t[:, 4 * Hh:] + r * gh[:, 4 * Hh:])           # (B, 2H)
        h_cat = (1.0 - zg) * n + zg * h_cat
        outs.append(h_cat)

    # Output at time tau: [h_f(tau) | h_b(tau)]; h_b(tau) was produced at step T-1-tau.
    y = jnp.stack(
        [jnp.concatenate([outs[t][:, :Hh], outs[T - 1 - t][:, Hh:]], axis=-1)
         for t in range(T)], axis=0)                      # (T, B, 2H)

    # ------------------ BatchNorm1d(num_f): vectorized batch stats, gamma=1, beta=0 ----
    inv_cnt = 1.0 / float(B * 2 * Hh)
    mean = jnp.sum(jnp.sum(y, axis=2, keepdims=True), axis=1, keepdims=True) * inv_cnt
    cen = y - mean
    var = jnp.sum(jnp.sum(cen * cen, axis=2, keepdims=True),
                  axis=1, keepdims=True) * inv_cnt        # biased var (torch training BN)
    o_ref[...] = cen * jax.lax.rsqrt(var + 1e-5)          # single whole-slab store


# --------------------------------------------------------------------------------------
# Wrapper: weight packing + per1 permute in XLA, one pallas_call, final cheap permute.
# --------------------------------------------------------------------------------------
def _pack_cols(a_f, a_b, Hh):
    # per-direction (.., 3H) [r z n] -> packed (.., 6H) [r_f r_b z_f z_b n_f n_b]
    return jnp.concatenate(
        [a_f[:, 0:Hh],           a_b[:, 0:Hh],
         a_f[:, Hh:2 * Hh],      a_b[:, Hh:2 * Hh],
         a_f[:, 2 * Hh:3 * Hh],  a_b[:, 2 * Hh:3 * Hh]], axis=1)


def stdcn_with_gru_pallas(X, Hadj, params):
    B, N, F = X.shape
    C = Hadj.shape[1]
    Hh = params["wh_f"].shape[0]
    G = 6 * Hh

    # SMEM scalars: [soft_0 .. soft_{C-1}, weight]
    scal = jnp.concatenate([params["soft"].astype(jnp.float32),
                            params["weight"].reshape(-1).astype(jnp.float32)])

    # One packed GRU slab: rows [wi (N) | wh block-diag (2H) | bi (1) | bh (1)].
    wi_pack = _pack_cols(params["wi_f"], params["wi_b"], Hh)                # (N, 6H)
    zeros3 = jnp.zeros((Hh, 3 * Hh), jnp.float32)
    wh_pack = jnp.concatenate(
        [_pack_cols(params["wh_f"], zeros3, Hh),
         _pack_cols(zeros3, params["wh_b"], Hh)], axis=0)                   # (2H, 6H)
    bi_pack = _pack_cols(params["bi_f"], params["bi_b"], Hh)                # (1, 6H)
    bh_pack = _pack_cols(params["bh_f"], params["bh_b"], Hh)                # (1, 6H)
    gru_slab = jnp.concatenate([wi_pack, wh_pack, bi_pack, bh_pack], axis=0)

    Xt = jnp.transpose(X, (0, 2, 1))      # per1: (B, N, F) -> (B, F, N), done in XLA

    flops = int(C * 2 * B * N * N * F                    # GCN batched matmuls
                + 2 * (B * F) * N * G                    # merged GRU input projection
                + F * 2 * B * (2 * Hh) * G)              # GRU hidden projections
    transc = int(F * 6 * B * Hh + C * B * N + F)         # sigmoid/tanh + rsqrt
    bytes_accessed = int((X.size + Hadj.size + scal.size + gru_slab.size
                          + F * B * 2 * Hh) * 4)

    vmem = pl.BlockSpec(memory_space=pltpu.MemorySpace.VMEM)
    smem = pl.BlockSpec(memory_space=pltpu.MemorySpace.SMEM)

    y = pl.pallas_call(
        _fused_kernel,
        out_shape=jax.ShapeDtypeStruct((F, B, 2 * Hh), jnp.float32),
        in_specs=[smem, vmem, vmem, vmem],
        out_specs=vmem,
        cost_estimate=pl.CostEstimate(flops=flops, transcendentals=transc,
                                      bytes_accessed=bytes_accessed),
    )(scal, Xt, Hadj, gru_slab)

    # kernel emitted time-major (num_f, B, 2H); per2 output is (B, 2H, num_f).
    return jnp.transpose(y, (1, 2, 0))


stdcn_with_gru_forward = jax.jit(stdcn_with_gru_pallas)


# --------------------------------------------------------------------------------------
# Pure-JAX reference (mirrors the PyTorch forward) for verification.
# --------------------------------------------------------------------------------------
def reference_forward(X, Hadj, p):
    B, N, F = X.shape
    C = Hadj.shape[1]
    eye = jnp.eye(N, dtype=jnp.float32)
    acc = jnp.zeros((B, N, F), jnp.float32)
    for i in range(C):
        Hm = Hadj[:, i] * (eye == 0) + eye
        deg = jnp.sum(Hm, axis=-1)
        dinv = deg ** -0.5
        Dinv = dinv[..., None] * eye
        Hn = Dinv @ Hm @ Dinv
        out = (Hn @ X) * p["weight"][0, 0]
        out = jnp.where(out >= 0, out, 0.01 * out)
        acc = acc + out * p["soft"][i]
    x = jnp.transpose(acc, (0, 2, 1))                    # (B, T=F, N)
    T = x.shape[1]
    Hh = p["wh_f"].shape[0]

    def cell(x_t, h, wi, wh, bi, bh):
        gi = x_t @ wi + bi
        gh = h @ wh + bh
        r = jax.nn.sigmoid(gi[:, :Hh] + gh[:, :Hh])
        z = jax.nn.sigmoid(gi[:, Hh:2 * Hh] + gh[:, Hh:2 * Hh])
        n = jnp.tanh(gi[:, 2 * Hh:] + r * gh[:, 2 * Hh:])
        return (1.0 - z) * n + z * h

    hf = jnp.zeros((x.shape[0], Hh), jnp.float32)
    hb = jnp.zeros((x.shape[0], Hh), jnp.float32)
    of = [None] * T
    ob = [None] * T
    for t in range(T):
        hf = cell(x[:, t], hf, p["wi_f"], p["wh_f"], p["bi_f"], p["bh_f"])
        of[t] = hf
        tr = T - 1 - t
        hb = cell(x[:, tr], hb, p["wi_b"], p["wh_b"], p["bi_b"], p["bh_b"])
        ob[tr] = hb
    y = jnp.concatenate([jnp.stack(of, 1), jnp.stack(ob, 1)], axis=-1)  # (B, T, 2H)
    mean = jnp.mean(y, axis=(0, 2), keepdims=True)
    var = jnp.mean((y - mean) ** 2, axis=(0, 2), keepdims=True)
    y = (y - mean) / jnp.sqrt(var + 1e-5)
    return jnp.transpose(y, (0, 2, 1))


if __name__ == "__main__":
    # Sizes: batch=2, num_channels=3, nodes (in_dim_with_c)=8, num_f (features/seq)=8,
    #        out_dim_with_c (GRU hidden)=16.
    B, C, N, F, Hh = 2, 3, 8, 8, 16

    key = jax.random.PRNGKey(0)
    k = jax.random.split(key, 12)
    X = jax.random.normal(k[0], (B, N, F), dtype=jnp.float32)
    # positive adjacency so deg**(-1/2) is well-defined (as in the torch module's intent)
    Hadj = jax.random.uniform(k[1], (B, C, N, N), dtype=jnp.float32)

    s = 1.0 / float(np.sqrt(Hh))

    def u(kk, shape):
        return jax.random.uniform(kk, shape, dtype=jnp.float32, minval=-s, maxval=s)

    params = {
        # nn.init.constant_ values from reset_parameters()
        "soft": jnp.full((C,), 1.0 / C, dtype=jnp.float32),
        "weight": jnp.full((1, 1), 10.0, dtype=jnp.float32),
        # GRU params stored pre-transposed: w_ih^T (N, 3H), w_hh^T (H, 3H), biases (1, 3H)
        "wi_f": u(k[2], (N, 3 * Hh)), "wh_f": u(k[3], (Hh, 3 * Hh)),
        "bi_f": u(k[4], (1, 3 * Hh)), "bh_f": u(k[5], (1, 3 * Hh)),
        "wi_b": u(k[6], (N, 3 * Hh)), "wh_b": u(k[7], (Hh, 3 * Hh)),
        "bi_b": u(k[8], (1, 3 * Hh)), "bh_b": u(k[9], (1, 3 * Hh)),
    }

    out = stdcn_with_gru_forward(X, Hadj, params)
    out = jax.block_until_ready(out)
    assert out.shape == (B, 2 * Hh, F), out.shape

    ref = reference_forward(X, Hadj, params)
    np.testing.assert_allclose(np.asarray(out), np.asarray(ref), rtol=2e-2, atol=2e-2)

    print("KERNEL_OK")
</pallas_src>

<mosaic_0001>
module attributes {stable_mosaic.version = 11 : i64} {
  func.func @_fused_kernel(%arg0: memref<4xf32, #tpu.memory_space<smem>>, %arg1: memref<2x8x8xf32, #tpu.memory_space<vmem>>, %arg2: memref<2x3x8x8xf32, #tpu.memory_space<vmem>>, %arg3: memref<42x96xf32, #tpu.memory_space<vmem>>, %arg4: memref<8x2x32xf32, #tpu.memory_space<vmem>>) attributes {dimension_semantics = [], scalar_prefetch = 0 : i64, scratch_operands = 0 : i64, tpu.core_type = #tpu.core_type<tc>} {
    %c0 = arith.constant 0 : index
    %c0_0 = arith.constant 0 : index
    %0 = vector.load %arg3[%c0, %c0_0] : memref<42x96xf32, #tpu.memory_space<vmem>>, vector<8x96xf32>
    %c8 = arith.constant 8 : index
    %c0_1 = arith.constant 0 : index
    %1 = vector.load %arg3[%c8, %c0_1] : memref<42x96xf32, #tpu.memory_space<vmem>>, vector<32x96xf32>
    %c40 = arith.constant 40 : index
    %c0_2 = arith.constant 0 : index
    %2 = vector.load %arg3[%c40, %c0_2] : memref<42x96xf32, #tpu.memory_space<vmem>>, vector<1x96xf32>
    %c41 = arith.constant 41 : index
    %c0_3 = arith.constant 0 : index
    %3 = vector.load %arg3[%c41, %c0_3] : memref<42x96xf32, #tpu.memory_space<vmem>>, vector<1x96xf32>
    %c3 = arith.constant 3 : index
    %4 = memref.load %arg0[%c3] : memref<4xf32, #tpu.memory_space<smem>>
    %c0_4 = arith.constant 0 : index
    %c0_5 = arith.constant 0 : index
    %c0_6 = arith.constant 0 : index
    %5 = vector.load %arg1[%c0_4, %c0_5, %c0_6] : memref<2x8x8xf32, #tpu.memory_space<vmem>>, vector<2x8x8xf32>
    %6 = tpu.iota {dimensions = array<i32: 1>} : vector<1x8x8xi32>
    %7 = tpu.iota {dimensions = array<i32: 2>} : vector<1x8x8xi32>
    %8 = arith.cmpi eq, %6, %7 : vector<1x8x8xi32>
    %cst = arith.constant 0.000000e+00 : f32
    %9 = vector.broadcast %cst : f32 to vector<2x8x8xf32>
    %c0_7 = arith.constant 0 : index
    %c0_8 = arith.constant 0 : index
    %c0_9 = arith.constant 0 : index
    %c0_10 = arith.constant 0 : index
    %10 = vector.load %arg2[%c0_7, %c0_8, %c0_9, %c0_10] : memref<2x3x8x8xf32, #tpu.memory_space<vmem>>, vector<2x1x8x8xf32>
    %11 = vector.shape_cast %10 : vector<2x1x8x8xf32> to vector<2x8x8xf32>
    %cst_11 = arith.constant 1.000000e+00 : f32
    %12 = vector.shape_cast %8 : vector<1x8x8xi1> to vector<1x8x8xi1>
    %13 = vector.broadcast %12 : vector<1x8x8xi1> to vector<2x8x8xi1>
    %14 = vector.broadcast %cst_11 : f32 to vector<2x8x8xf32>
    %15 = arith.select %13, %14, %11 : vector<2x8x8xi1>, vector<2x8x8xf32>
    %cst_12 = arith.constant dense<0.000000e+00> : vector<2x8xf32>
    %16 = vector.multi_reduction <add>, %15, %cst_12 [2] : vector<2x8x8xf32> to vector<2x8xf32>
    %17 = math.rsqrt %16 : vector<2x8xf32>
    %18 = vector.shape_cast %17 : vector<2x8xf32> to vector<2x1x8xf32>
    %19 = vector.broadcast %18 : vector<2x1x8xf32> to vector<2x8x8xf32>
    %20 = arith.mulf %5, %19 : vector<2x8x8xf32>
    "tpu.trace_start"() <{level = 10 : i32, message = "bfm,bnm->bfn"}> : () -> ()
    %cst_13 = arith.constant dense<0.000000e+00> : vector<2x8x8xf32>
    %21 = tpu.matmul %20, %15, %cst_13 {dimension_numbers = #tpu.dot_dimension_numbers<[2], [2], [1], [1], [0, 0, 0, 1, 1, 1], [0], [0]>} : vector<2x8x8xf32>, vector<2x8x8xf32>, vector<2x8x8xf32> -> vector<2x8x8xf32>
    "tpu.trace_stop"() : () -> ()
    %22 = vector.broadcast %4 : f32 to vector<2x1x8xf32>
    %23 = arith.mulf %18, %22 : vector<2x1x8xf32>
    %24 = vector.broadcast %23 : vector<2x1x8xf32> to vector<2x8x8xf32>
    %25 = arith.mulf %21, %24 : vector<2x8x8xf32>
    %cst_14 = arith.constant 0.000000e+00 : f32
    %26 = vector.broadcast %cst_14 : f32 to vector<2x8x8xf32>
    %27 = arith.cmpf oge, %25, %26 : vector<2x8x8xf32>
    %cst_15 = arith.constant 0.00999999977 : f32
    %28 = vector.broadcast %cst_15 : f32 to vector<2x8x8xf32>
    %29 = arith.mulf %28, %25 : vector<2x8x8xf32>
    %30 = arith.select %27, %25, %29 : vector<2x8x8xi1>, vector<2x8x8xf32>
    %c0_16 = arith.constant 0 : index
    %31 = memref.load %arg0[%c0_16] : memref<4xf32, #tpu.memory_space<smem>>
    %32 = vector.broadcast %31 : f32 to vector<2x8x8xf32>
    %33 = arith.mulf %30, %32 : vector<2x8x8xf32>
    %34 = arith.addf %9, %33 : vector<2x8x8xf32>
    %c0_17 = arith.constant 0 : index
    %c1 = arith.constant 1 : index
    %c0_18 = arith.constant 0 : index
    %c0_19 = arith.constant 0 : index
    %35 = vector.load %arg2[%c0_17, %c1, %c0_18, %c0_19] : memref<2x3x8x8xf32, #tpu.memory_space<vmem>>, vector<2x1x8x8xf32>
    %36 = vector.shape_cast %35 : vector<2x1x8x8xf32> to vector<2x8x8xf32>
    %cst_20 = arith.constant 1.000000e+00 : f32
    %37 = vector.shape_cast %8 : vector<1x8x8xi1> to vector<1x8x8xi1>
    %38 = vector.broadcast %37 : vector<1x8x8xi1> to vector<2x8x8xi1>
    %39 = vector.broadcast %cst_20 : f32 to vector<2x8x8xf32>
    %40 = arith.select %38, %39, %36 : vector<2x8x8xi1>, vector<2x8x8xf32>
    %cst_21 = arith.constant dense<0.000000e+00> : vector<2x8xf32>
    %41 = vector.multi_reduction <add>, %40, %cst_21 [2] : vector<2x8x8xf32> to vector<2x8xf32>
    %42 = math.rsqrt %41 : vector<2x8xf32>
    %43 = vector.shape_cast %42 : vector<2x8xf32> to vector<2x1x8xf32>
    %44 = vector.broadcast %43 : vector<2x1x8xf32> to vector<2x8x8xf32>
    %45 = arith.mulf %5, %44 : vector<2x8x8xf32>
    "tpu.trace_start"() <{level = 10 : i32, message = "bfm,bnm->bfn"}> : () -> ()
    %cst_22 = arith.constant dense<0.000000e+00> : vector<2x8x8xf32>
    %46 = tpu.matmul %45, %40, %cst_22 {dimension_numbers = #tpu.dot_dimension_numbers<[2], [2], [1], [1], [0, 0, 0, 1, 1, 1], [0], [0]>} : vector<2x8x8xf32>, vector<2x8x8xf32>, vector<2x8x8xf32> -> vector<2x8x8xf32>
    "tpu.trace_stop"() : () -> ()
    %47 = vector.broadcast %4 : f32 to vector<2x1x8xf32>
    %48 = arith.mulf %43, %47 : vector<2x1x8xf32>
    %49 = vector.broadcast %48 : vector<2x1x8xf32> to vector<2x8x8xf32>
    %50 = arith.mulf %46, %49 : vector<2x8x8xf32>
    %cst_23 = arith.constant 0.000000e+00 : f32
    %51 = vector.broadcast %cst_23 : f32 to vector<2x8x8xf32>
    %52 = arith.cmpf oge, %50, %51 : vector<2x8x8xf32>
    %cst_24 = arith.constant 0.00999999977 : f32
    %53 = vector.broadcast %cst_24 : f32 to vector<2x8x8xf32>
    %54 = arith.mulf %53, %50 : vector<2x8x8xf32>
    %55 = arith.select %52, %50, %54 : vector<2x8x8xi1>, vector<2x8x8xf32>
    %c1_25 = arith.constant 1 : index
    %56 = memref.load %arg0[%c1_25] : memref<4xf32, #tpu.memory_space<smem>>
    %57 = vector.broadcast %56 : f32 to vector<2x8x8xf32>
    %58 = arith.mulf %55, %57 : vector<2x8x8xf32>
    %59 = arith.addf %34, %58 : vector<2x8x8xf32>
    %c0_26 = arith.constant 0 : index
    %c2 = arith.constant 2 : index
    %c0_27 = arith.constant 0 : index
    %c0_28 = arith.constant 0 : index
    %60 = vector.load %arg2[%c0_26, %c2, %c0_27, %c0_28] : memref<2x3x8x8xf32, #tpu.memory_space<vmem>>, vector<2x1x8x8xf32>
    %61 = vector.shape_cast %60 : vector<2x1x8x8xf32> to vector<2x8x8xf32>
    %cst_29 = arith.constant 1.000000e+00 : f32
    %62 = vector.shape_cast %8 : vector<1x8x8xi1> to vector<1x8x8xi1>
    %63 = vector.broadcast %62 : vector<1x8x8xi1> to vector<2x8x8xi1>
    %64 = vector.broadcast %cst_29 : f32 to vector<2x8x8xf32>
    %65 = arith.select %63, %64, %61 : vector<2x8x8xi1>, vector<2x8x8xf32>
    %cst_30 = arith.constant dense<0.000000e+00> : vector<2x8xf32>
    %66 = vector.multi_reduction <add>, %65, %cst_30 [2] : vector<2x8x8xf32> to vector<2x8xf32>
    %67 = math.rsqrt %66 : vector<2x8xf32>
    %68 = vector.shape_cast %67 : vector<2x8xf32> to vector<2x1x8xf32>
    %69 = vector.broadcast %68 : vector<2x1x8xf32> to vector<2x8x8xf32>
    %70 = arith.mulf %5, %69 : vector<2x8x8xf32>
    "tpu.trace_start"() <{level = 10 : i32, message = "bfm,bnm->bfn"}> : () -> ()
    %cst_31 = arith.constant dense<0.000000e+00> : vector<2x8x8xf32>
    %71 = tpu.matmul %70, %65, %cst_31 {dimension_numbers = #tpu.dot_dimension_numbers<[2], [2], [1], [1], [0, 0, 0, 1, 1, 1], [0], [0]>} : vector<2x8x8xf32>, vector<2x8x8xf32>, vector<2x8x8xf32> -> vector<2x8x8xf32>
    "tpu.trace_stop"() : () -> ()
    %72 = vector.broadcast %4 : f32 to vector<2x1x8xf32>
    %73 = arith.mulf %68, %72 : vector<2x1x8xf32>
    %74 = vector.broadcast %73 : vector<2x1x8xf32> to vector<2x8x8xf32>
    %75 = arith.mulf %71, %74 : vector<2x8x8xf32>
    %cst_32 = arith.constant 0.000000e+00 : f32
    %76 = vector.broadcast %cst_32 : f32 to vector<2x8x8xf32>
    %77 = arith.cmpf oge, %75, %76 : vector<2x8x8xf32>
    %cst_33 = arith.constant 0.00999999977 : f32
    %78 = vector.broadcast %cst_33 : f32 to vector<2x8x8xf32>
    %79 = arith.mulf %78, %75 : vector<2x8x8xf32>
    %80 = arith.select %77, %75, %79 : vector<2x8x8xi1>, vector<2x8x8xf32>
    %c2_34 = arith.constant 2 : index
    %81 = memref.load %arg0[%c2_34] : memref<4xf32, #tpu.memory_space<smem>>
    %82 = vector.broadcast %81 : f32 to vector<2x8x8xf32>
    %83 = arith.mulf %80, %82 : vector<2x8x8xf32>
    %84 = arith.addf %59, %83 : vector<2x8x8xf32>
    %85 = vector.shape_cast %84 : vector<2x8x8xf32> to vector<16x8xf32>
    %cst_35 = arith.constant dense<0.000000e+00> : vector<16x96xf32>
    %86 = tpu.matmul %85, %0, %cst_35 {dimension_numbers = #tpu.dot_dimension_numbers<[1], [0], [0], [1], [0, 0, 1, 1], [], []>} : vector<16x8xf32>, vector<8x96xf32>, vector<16x96xf32> -> vector<16x96xf32>
    %87 = vector.broadcast %2 : vector<1x96xf32> to vector<16x96xf32>
    %88 = arith.addf %86, %87 : vector<16x96xf32>
    %89 = vector.shape_cast %88 : vector<16x96xf32> to vector<2x8x96xf32>
    %cst_36 = arith.constant 0.000000e+00 : f32
    %90 = vector.broadcast %cst_36 : f32 to vector<2x32xf32>
    %91 = vector.extract_strided_slice %89 {offsets = [0, 0, 0], sizes = [2, 1, 96], strides = [1, 1, 1]} : vector<2x8x96xf32> to vector<2x1x96xf32>
    %92 = vector.shape_cast %91 : vector<2x1x96xf32> to vector<2x96xf32>
    %93 = vector.extract_strided_slice %89 {offsets = [0, 7, 0], sizes = [2, 1, 96], strides = [1, 1, 1]} : vector<2x8x96xf32> to vector<2x1x96xf32>
    %94 = vector.shape_cast %93 : vector<2x1x96xf32> to vector<2x96xf32>
    %95 = vector.extract_strided_slice %92 {offsets = [0, 0], sizes = [2, 16], strides = [1, 1]} : vector<2x96xf32> to vector<2x16xf32>
    %96 = vector.extract_strided_slice %94 {offsets = [0, 16], sizes = [2, 16], strides = [1, 1]} : vector<2x96xf32> to vector<2x16xf32>
    %97 = vector.extract_strided_slice %92 {offsets = [0, 32], sizes = [2, 16], strides = [1, 1]} : vector<2x96xf32> to vector<2x16xf32>
    %98 = vector.extract_strided_slice %94 {offsets = [0, 48], sizes = [2, 16], strides = [1, 1]} : vector<2x96xf32> to vector<2x16xf32>
    %99 = vector.extract_strided_slice %92 {offsets = [0, 64], sizes = [2, 16], strides = [1, 1]} : vector<2x96xf32> to vector<2x16xf32>
    %100 = vector.extract_strided_slice %94 {offsets = [0, 80], sizes = [2, 16], strides = [1, 1]} : vector<2x96xf32> to vector<2x16xf32>
    %101 = tpu.concatenate %95, %96, %97, %98, %99, %100 in 1 : vector<2x16xf32>, vector<2x16xf32>, vector<2x16xf32>, vector<2x16xf32>, vector<2x16xf32>, vector<2x16xf32> -> vector<2x96xf32>
    %cst_37 = arith.constant dense<0.000000e+00> : vector<2x96xf32>
    %102 = tpu.matmul %90, %1, %cst_37 {dimension_numbers = #tpu.dot_dimension_numbers<[1], [0], [0], [1], [0, 0, 1, 1], [], []>} : vector<2x32xf32>, vector<32x96xf32>, vector<2x96xf32> -> vector<2x96xf32>
    %103 = vector.broadcast %3 : vector<1x96xf32> to vector<2x96xf32>
    %104 = arith.addf %102, %103 : vector<2x96xf32>
    %105 = vector.extract_strided_slice %101 {offsets = [0, 0], sizes = [2, 64], strides = [1, 1]} : vector<2x96xf32> to vector<2x64xf32>
    %106 = vector.extract_strided_slice %104 {offsets = [0, 0], sizes = [2, 64], strides = [1, 1]} : vector<2x96xf32> to vector<2x64xf32>
    %107 = arith.addf %105, %106 : vector<2x64xf32>
    %108 = arith.negf %107 : vector<2x64xf32>
    %109 = math.exp %108 : vector<2x64xf32>
    %cst_38 = arith.constant 1.000000e+00 : f32
    %110 = vector.broadcast %cst_38 : f32 to vector<2x64xf32>
    %111 = arith.addf %110, %109 : vector<2x64xf32>
    %112 = arith.divf %110, %111 : vector<2x64xf32>
    %113 = vector.extract_strided_slice %112 {offsets = [0, 0], sizes = [2, 32], strides = [1, 1]} : vector<2x64xf32> to vector<2x32xf32>
    %114 = vector.extract_strided_slice %112 {offsets = [0, 32], sizes = [2, 32], strides = [1, 1]} : vector<2x64xf32> to vector<2x32xf32>
    %115 = vector.extract_strided_slice %101 {offsets = [0, 64], sizes = [2, 32], strides = [1, 1]} : vector<2x96xf32> to vector<2x32xf32>
    %116 = vector.extract_strided_slice %104 {offsets = [0, 64], sizes = [2, 32], strides = [1, 1]} : vector<2x96xf32> to vector<2x32xf32>
    %117 = arith.mulf %113, %116 : vector<2x32xf32>
    %118 = arith.addf %115, %117 : vector<2x32xf32>
    %119 = math.tanh %118 : vector<2x32xf32>
    %cst_39 = arith.constant 1.000000e+00 : f32
    %120 = vector.broadcast %cst_39 : f32 to vector<2x32xf32>
    %121 = arith.subf %120, %114 : vector<2x32xf32>
    %122 = arith.mulf %121, %119 : vector<2x32xf32>
    %123 = arith.mulf %114, %90 : vector<2x32xf32>
    %124 = arith.addf %122, %123 : vector<2x32xf32>
    %125 = vector.extract_strided_slice %89 {offsets = [0, 1, 0], sizes = [2, 1, 96], strides = [1, 1, 1]} : vector<2x8x96xf32> to vector<2x1x96xf32>
    %126 = vector.shape_cast %125 : vector<2x1x96xf32> to vector<2x96xf32>
    %127 = vector.extract_strided_slice %89 {offsets = [0, 6, 0], sizes = [2, 1, 96], strides = [1, 1, 1]} : vector<2x8x96xf32> to vector<2x1x96xf32>
    %128 = vector.shape_cast %127 : vector<2x1x96xf32> to vector<2x96xf32>
    %129 = vector.extract_strided_slice %126 {offsets = [0, 0], sizes = [2, 16], strides = [1, 1]} : vector<2x96xf32> to vector<2x16xf32>
    %130 = vector.extract_strided_slice %128 {offsets = [0, 16], sizes = [2, 16], strides = [1, 1]} : vector<2x96xf32> to vector<2x16xf32>
    %131 = vector.extract_strided_slice %126 {offsets = [0, 32], sizes = [2, 16], strides = [1, 1]} : vector<2x96xf32> to vector<2x16xf32>
    %132 = vector.extract_strided_slice %128 {offsets = [0, 48], sizes = [2, 16], strides = [1, 1]} : vector<2x96xf32> to vector<2x16xf32>
    %133 = vector.extract_strided_slice %126 {offsets = [0, 64], sizes = [2, 16], strides = [1, 1]} : vector<2x96xf32> to vector<2x16xf32>
    %134 = vector.extract_strided_slice %128 {offsets = [0, 80], sizes = [2, 16], strides = [1, 1]} : vector<2x96xf32> to vector<2x16xf32>
    %135 = tpu.concatenate %129, %130, %131, %132, %133, %134 in 1 : vector<2x16xf32>, vector<2x16xf32>, vector<2x16xf32>, vector<2x16xf32>, vector<2x16xf32>, vector<2x16xf32> -> vector<2x96xf32>
    %cst_40 = arith.constant dense<0.000000e+00> : vector<2x96xf32>
    %136 = tpu.matmul %124, %1, %cst_40 {dimension_numbers = #tpu.dot_dimension_numbers<[1], [0], [0], [1], [0, 0, 1, 1], [], []>} : vector<2x32xf32>, vector<32x96xf32>, vector<2x96xf32> -> vector<2x96xf32>
    %137 = vector.broadcast %3 : vector<1x96xf32> to vector<2x96xf32>
    %138 = arith.addf %136, %137 : vector<2x96xf32>
    %139 = vector.extract_strided_slice %135 {offsets = [0, 0], sizes = [2, 64], strides = [1, 1]} : vector<2x96xf32> to vector<2x64xf32>
    %140 = vector.extract_strided_slice %138 {offsets = [0, 0], sizes = [2, 64], strides = [1, 1]} : vector<2x96xf32> to vector<2x64xf32>
    %141 = arith.addf %139, %140 : vector<2x64xf32>
    %142 = arith.negf %141 : vector<2x64xf32>
    %143 = math.exp %142 : vector<2x64xf32>
    %cst_41 = arith.constant 1.000000e+00 : f32
    %144 = vector.broadcast %cst_41 : f32 to vector<2x64xf32>
    %145 = arith.addf %144, %143 : vector<2x64xf32>
    %146 = arith.divf %144, %145 : vector<2x64xf32>
    %147 = vector.extract_strided_slice %146 {offsets = [0, 0], sizes = [2, 32], strides = [1, 1]} : vector<2x64xf32> to vector<2x32xf32>
    %148 = vector.extract_strided_slice %146 {offsets = [0, 32], sizes = [2, 32], strides = [1, 1]} : vector<2x64xf32> to vector<2x32xf32>
    %149 = vector.extract_strided_slice %135 {offsets = [0, 64], sizes = [2, 32], strides = [1, 1]} : vector<2x96xf32> to vector<2x32xf32>
    %150 = vector.extract_strided_slice %138 {offsets = [0, 64], sizes = [2, 32], strides = [1, 1]} : vector<2x96xf32> to vector<2x32xf32>
    %151 = arith.mulf %147, %150 : vector<2x32xf32>
    %152 = arith.addf %149, %151 : vector<2x32xf32>
    %153 = math.tanh %152 : vector<2x32xf32>
    %cst_42 = arith.constant 1.000000e+00 : f32
    %154 = vector.broadcast %cst_42 : f32 to vector<2x32xf32>
    %155 = arith.subf %154, %148 : vector<2x32xf32>
    %156 = arith.mulf %155, %153 : vector<2x32xf32>
    %157 = arith.mulf %148, %124 : vector<2x32xf32>
    %158 = arith.addf %156, %157 : vector<2x32xf32>
    %159 = vector.extract_strided_slice %89 {offsets = [0, 2, 0], sizes = [2, 1, 96], strides = [1, 1, 1]} : vector<2x8x96xf32> to vector<2x1x96xf32>
    %160 = vector.shape_cast %159 : vector<2x1x96xf32> to vector<2x96xf32>
    %161 = vector.extract_strided_slice %89 {offsets = [0, 5, 0], sizes = [2, 1, 96], strides = [1, 1, 1]} : vector<2x8x96xf32> to vector<2x1x96xf32>
    %162 = vector.shape_cast %161 : vector<2x1x96xf32> to vector<2x96xf32>
    %163 = vector.extract_strided_slice %160 {offsets = [0, 0], sizes = [2, 16], strides = [1, 1]} : vector<2x96xf32> to vector<2x16xf32>
    %164 = vector.extract_strided_slice %162 {offsets = [0, 16], sizes = [2, 16], strides = [1, 1]} : vector<2x96xf32> to vector<2x16xf32>
    %165 = vector.extract_strided_slice %160 {offsets = [0, 32], sizes = [2, 16], strides = [1, 1]} : vector<2x96xf32> to vector<2x16xf32>
    %166 = vector.extract_strided_slice %162 {offsets = [0, 48], sizes = [2, 16], strides = [1, 1]} : vector<2x96xf32> to vector<2x16xf32>
    %167 = vector.extract_strided_slice %160 {offsets = [0, 64], sizes = [2, 16], strides = [1, 1]} : vector<2x96xf32> to vector<2x16xf32>
    %168 = vector.extract_strided_slice %162 {offsets = [0, 80], sizes = [2, 16], strides = [1, 1]} : vector<2x96xf32> to vector<2x16xf32>
    %169 = tpu.concatenate %163, %164, %165, %166, %167, %168 in 1 : vector<2x16xf32>, vector<2x16xf32>, vector<2x16xf32>, vector<2x16xf32>, vector<2x16xf32>, vector<2x16xf32> -> vector<2x96xf32>
    %cst_43 = arith.constant dense<0.000000e+00> : vector<2x96xf32>
    %170 = tpu.matmul %158, %1, %cst_43 {dimension_numbers = #tpu.dot_dimension_numbers<[1], [0], [0], [1], [0, 0, 1, 1], [], []>} : vector<2x32xf32>, vector<32x96xf32>, vector<2x96xf32> -> vector<2x96xf32>
    %171 = vector.broadcast %3 : vector<1x96xf32> to vector<2x96xf32>
    %172 = arith.addf %170, %171 : vector<2x96xf32>
    %173 = vector.extract_strided_slice %169 {offsets = [0, 0], sizes = [2, 64], strides = [1, 1]} : vector<2x96xf32> to vector<2x64xf32>
    %174 = vector.extract_strided_slice %172 {offsets = [0, 0], sizes = [2, 64], strides = [1, 1]} : vector<2x96xf32> to vector<2x64xf32>
    %175 = arith.addf %173, %174 : vector<2x64xf32>
    %176 = arith.negf %175 : vector<2x64xf32>
    %177 = math.exp %176 : vector<2x64xf32>
    %cst_44 = arith.constant 1.000000e+00 : f32
    %178 = vector.broadcast %cst_44 : f32 to vector<2x64xf32>
    %179 = arith.addf %178, %177 : vector<2x64xf32>
    %180 = arith.divf %178, %179 : vector<2x64xf32>
    %181 = vector.extract_strided_slice %180 {offsets = [0, 0], sizes = [2, 32], strides = [1, 1]} : vector<2x64xf32> to vector<2x32xf32>
    %182 = vector.extract_strided_slice %180 {offsets = [0, 32], sizes = [2, 32], strides = [1, 1]} : vector<2x64xf32> to vector<2x32xf32>
    %183 = vector.extract_strided_slice %169 {offsets = [0, 64], sizes = [2, 32], strides = [1, 1]} : vector<2x96xf32> to vector<2x32xf32>
    %184 = vector.extract_strided_slice %172 {offsets = [0, 64], sizes = [2, 32], strides = [1, 1]} : vector<2x96xf32> to vector<2x32xf32>
    %185 = arith.mulf %181, %184 : vector<2x32xf32>
    %186 = arith.addf %183, %185 : vector<2x32xf32>
    %187 = math.tanh %186 : vector<2x32xf32>
    %cst_45 = arith.constant 1.000000e+00 : f32
    %188 = vector.broadcast %cst_45 : f32 to vector<2x32xf32>
    %189 = arith.subf %188, %182 : vector<2x32xf32>
    %190 = arith.mulf %189, %187 : vector<2x32xf32>
    %191 = arith.mulf %182, %158 : vector<2x32xf32>
    %192 = arith.addf %190, %191 : vector<2x32xf32>
    %193 = vector.extract_strided_slice %89 {offsets = [0, 3, 0], sizes = [2, 1, 96], strides = [1, 1, 1]} : vector<2x8x96xf32> to vector<2x1x96xf32>
    %194 = vector.shape_cast %193 : vector<2x1x96xf32> to vector<2x96xf32>
    %195 = vector.extract_strided_slice %89 {offsets = [0, 4, 0], sizes = [2, 1, 96], strides = [1, 1, 1]} : vector<2x8x96xf32> to vector<2x1x96xf32>
    %196 = vector.shape_cast %195 : vector<2x1x96xf32> to vector<2x96xf32>
    %197 = vector.extract_strided_slice %194 {offsets = [0, 0], sizes = [2, 16], strides = [1, 1]} : vector<2x96xf32> to vector<2x16xf32>
    %198 = vector.extract_strided_slice %196 {offsets = [0, 16], sizes = [2, 16], strides = [1, 1]} : vector<2x96xf32> to vector<2x16xf32>
    %199 = vector.extract_strided_slice %194 {offsets = [0, 32], sizes = [2, 16], strides = [1, 1]} : vector<2x96xf32> to vector<2x16xf32>
    %200 = vector.extract_strided_slice %196 {offsets = [0, 48], sizes = [2, 16], strides = [1, 1]} : vector<2x96xf32> to vector<2x16xf32>
    %201 = vector.extract_strided_slice %194 {offsets = [0, 64], sizes = [2, 16], strides = [1, 1]} : vector<2x96xf32> to vector<2x16xf32>
    %202 = vector.extract_strided_slice %196 {offsets = [0, 80], sizes = [2, 16], strides = [1, 1]} : vector<2x96xf32> to vector<2x16xf32>
    %203 = tpu.concatenate %197, %198, %199, %200, %201, %202 in 1 : vector<2x16xf32>, vector<2x16xf32>, vector<2x16xf32>, vector<2x16xf32>, vector<2x16xf32>, vector<2x16xf32> -> vector<2x96xf32>
    %cst_46 = arith.constant dense<0.000000e+00> : vector<2x96xf32>
    %204 = tpu.matmul %192, %1, %cst_46 {dimension_numbers = #tpu.dot_dimension_numbers<[1], [0], [0], [1], [0, 0, 1, 1], [], []>} : vector<2x32xf32>, vector<32x96xf32>, vector<2x96xf32> -> vector<2x96xf32>
    %205 = vector.broadcast %3 : vector<1x96xf32> to vector<2x96xf32>
    %206 = arith.addf %204, %205 : vector<2x96xf32>
    %207 = vector.extract_strided_slice %203 {offsets = [0, 0], sizes = [2, 64], strides = [1, 1]} : vector<2x96xf32> to vector<2x64xf32>
    %208 = vector.extract_strided_slice %206 {offsets = [0, 0], sizes = [2, 64], strides = [1, 1]} : vector<2x96xf32> to vector<2x64xf32>
    %209 = arith.addf %207, %208 : vector<2x64xf32>
    %210 = arith.negf %209 : vector<2x64xf32>
    %211 = math.exp %210 : vector<2x64xf32>
    %cst_47 = arith.constant 1.000000e+00 : f32
    %212 = vector.broadcast %cst_47 : f32 to vector<2x64xf32>
    %213 = arith.addf %212, %211 : vector<2x64xf32>
    %214 = arith.divf %212, %213 : vector<2x64xf32>
    %215 = vector.extract_strided_slice %214 {offsets = [0, 0], sizes = [2, 32], strides = [1, 1]} : vector<2x64xf32> to vector<2x32xf32>
    %216 = vector.extract_strided_slice %214 {offsets = [0, 32], sizes = [2, 32], strides = [1, 1]} : vector<2x64xf32> to vector<2x32xf32>
    %217 = vector.extract_strided_slice %203 {offsets = [0, 64], sizes = [2, 32], strides = [1, 1]} : vector<2x96xf32> to vector<2x32xf32>
    %218 = vector.extract_strided_slice %206 {offsets = [0, 64], sizes = [2, 32], strides = [1, 1]} : vector<2x96xf32> to vector<2x32xf32>
    %219 = arith.mulf %215, %218 : vector<2x32xf32>
    %220 = arith.addf %217, %219 : vector<2x32xf32>
    %221 = math.tanh %220 : vector<2x32xf32>
    %cst_48 = arith.constant 1.000000e+00 : f32
    %222 = vector.broadcast %cst_48 : f32 to vector<2x32xf32>
    %223 = arith.subf %222, %216 : vector<2x32xf32>
    %224 = arith.mulf %223, %221 : vector<2x32xf32>
    %225 = arith.mulf %216, %192 : vector<2x32xf32>
    %226 = arith.addf %224, %225 : vector<2x32xf32>
    %227 = vector.extract_strided_slice %89 {offsets = [0, 4, 0], sizes = [2, 1, 96], strides = [1, 1, 1]} : vector<2x8x96xf32> to vector<2x1x96xf32>
    %228 = vector.shape_cast %227 : vector<2x1x96xf32> to vector<2x96xf32>
    %229 = vector.extract_strided_slice %89 {offsets = [0, 3, 0], sizes = [2, 1, 96], strides = [1, 1, 1]} : vector<2x8x96xf32> to vector<2x1x96xf32>
    %230 = vector.shape_cast %229 : vector<2x1x96xf32> to vector<2x96xf32>
    %231 = vector.extract_strided_slice %228 {offsets = [0, 0], sizes = [2, 16], strides = [1, 1]} : vector<2x96xf32> to vector<2x16xf32>
    %232 = vector.extract_strided_slice %230 {offsets = [0, 16], sizes = [2, 16], strides = [1, 1]} : vector<2x96xf32> to vector<2x16xf32>
    %233 = vector.extract_strided_slice %228 {offsets = [0, 32], sizes = [2, 16], strides = [1, 1]} : vector<2x96xf32> to vector<2x16xf32>
    %234 = vector.extract_strided_slice %230 {offsets = [0, 48], sizes = [2, 16], strides = [1, 1]} : vector<2x96xf32> to vector<2x16xf32>
    %235 = vector.extract_strided_slice %228 {offsets = [0, 64], sizes = [2, 16], strides = [1, 1]} : vector<2x96xf32> to vector<2x16xf32>
    %236 = vector.extract_strided_slice %230 {offsets = [0, 80], sizes = [2, 16], strides = [1, 1]} : vector<2x96xf32> to vector<2x16xf32>
    %237 = tpu.concatenate %231, %232, %233, %234, %235, %236 in 1 : vector<2x16xf32>, vector<2x16xf32>, vector<2x16xf32>, vector<2x16xf32>, vector<2x16xf32>, vector<2x16xf32> -> vector<2x96xf32>
    %cst_49 = arith.constant dense<0.000000e+00> : vector<2x96xf32>
    %238 = tpu.matmul %226, %1, %cst_49 {dimension_numbers = #tpu.dot_dimension_numbers<[1], [0], [0], [1], [0, 0, 1, 1], [], []>} : vector<2x32xf32>, vector<32x96xf32>, vector<2x96xf32> -> vector<2x96xf32>
    %239 = vector.broadcast %3 : vector<1x96xf32> to vector<2x96xf32>
    %240 = arith.addf %238, %239 : vector<2x96xf32>
    %241 = vector.extract_strided_slice %237 {offsets = [0, 0], sizes = [2, 64], strides = [1, 1]} : vector<2x96xf32> to vector<2x64xf32>
    %242 = vector.extract_strided_slice %240 {offsets = [0, 0], sizes = [2, 64], strides = [1, 1]} : vector<2x96xf32> to vector<2x64xf32>
    %243 = arith.addf %241, %242 : vector<2x64xf32>
    %244 = arith.negf %243 : vector<2x64xf32>
    %245 = math.exp %244 : vector<2x64xf32>
    %cst_50 = arith.constant 1.000000e+00 : f32
    %246 = vector.broadcast %cst_50 : f32 to vector<2x64xf32>
    %247 = arith.addf %246, %245 : vector<2x64xf32>
    %248 = arith.divf %246, %247 : vector<2x64xf32>
    %249 = vector.extract_strided_slice %248 {offsets = [0, 0], sizes = [2, 32], strides = [1, 1]} : vector<2x64xf32> to vector<2x32xf32>
    %250 = vector.extract_strided_slice %248 {offsets = [0, 32], sizes = [2, 32], strides = [1, 1]} : vector<2x64xf32> to vector<2x32xf32>
    %251 = vector.extract_strided_slice %237 {offsets = [0, 64], sizes = [2, 32], strides = [1, 1]} : vector<2x96xf32> to vector<2x32xf32>
    %252 = vector.extract_strided_slice %240 {offsets = [0, 64], sizes = [2, 32], strides = [1, 1]} : vector<2x96xf32> to vector<2x32xf32>
    %253 = arith.mulf %249, %252 : vector<2x32xf32>
    %254 = arith.addf %251, %253 : vector<2x32xf32>
    %255 = math.tanh %254 : vector<2x32xf32>
    %cst_51 = arith.constant 1.000000e+00 : f32
    %256 = vector.broadcast %cst_51 : f32 to vector<2x32xf32>
    %257 = arith.subf %256, %250 : vector<2x32xf32>
    %258 = arith.mulf %257, %255 : vector<2x32xf32>
    %259 = arith.mulf %250, %226 : vector<2x32xf32>
    %260 = arith.addf %258, %259 : vector<2x32xf32>
    %261 = vector.extract_strided_slice %89 {offsets = [0, 5, 0], sizes = [2, 1, 96], strides = [1, 1, 1]} : vector<2x8x96xf32> to vector<2x1x96xf32>
    %262 = vector.shape_cast %261 : vector<2x1x96xf32> to vector<2x96xf32>
    %263 = vector.extract_strided_slice %89 {offsets = [0, 2, 0], sizes = [2, 1, 96], strides = [1, 1, 1]} : vector<2x8x96xf32> to vector<2x1x96xf32>
    %264 = vector.shape_cast %263 : vector<2x1x96xf32> to vector<2x96xf32>
    %265 = vector.extract_strided_slice %262 {offsets = [0, 0], sizes = [2, 16], strides = [1, 1]} : vector<2x96xf32> to vector<2x16xf32>
    %266 = vector.extract_strided_slice %264 {offsets = [0, 16], sizes = [2, 16], strides = [1, 1]} : vector<2x96xf32> to vector<2x16xf32>
    %267 = vector.extract_strided_slice %262 {offsets = [0, 32], sizes = [2, 16], strides = [1, 1]} : vector<2x96xf32> to vector<2x16xf32>
    %268 = vector.extract_strided_slice %264 {offsets = [0, 48], sizes = [2, 16], strides = [1, 1]} : vector<2x96xf32> to vector<2x16xf32>
    %269 = vector.extract_strided_slice %262 {offsets = [0, 64], sizes = [2, 16], strides = [1, 1]} : vector<2x96xf32> to vector<2x16xf32>
    %270 = vector.extract_strided_slice %264 {offsets = [0, 80], sizes = [2, 16], strides = [1, 1]} : vector<2x96xf32> to vector<2x16xf32>
    %271 = tpu.concatenate %265, %266, %267, %268, %269, %270 in 1 : vector<2x16xf32>, vector<2x16xf32>, vector<2x16xf32>, vector<2x16xf32>, vector<2x16xf32>, vector<2x16xf32> -> vector<2x96xf32>
    %cst_52 = arith.constant dense<0.000000e+00> : vector<2x96xf32>
    %272 = tpu.matmul %260, %1, %cst_52 {dimension_numbers = #tpu.dot_dimension_numbers<[1], [0], [0], [1], [0, 0, 1, 1], [], []>} : vector<2x32xf32>, vector<32x96xf32>, vector<2x96xf32> -> vector<2x96xf32>
    %273 = vector.broadcast %3 : vector<1x96xf32> to vector<2x96xf32>
    %274 = arith.addf %272, %273 : vector<2x96xf32>
    %275 = vector.extract_strided_slice %271 {offsets = [0, 0], sizes = [2, 64], strides = [1, 1]} : vector<2x96xf32> to vector<2x64xf32>
    %276 = vector.extract_strided_slice %274 {offsets = [0, 0], sizes = [2, 64], strides = [1, 1]} : vector<2x96xf32> to vector<2x64xf32>
    %277 = arith.addf %275, %276 : vector<2x64xf32>
    %278 = arith.negf %277 : vector<2x64xf32>
    %279 = math.exp %278 : vector<2x64xf32>
    %cst_53 = arith.constant 1.000000e+00 : f32
    %280 = vector.broadcast %cst_53 : f32 to vector<2x64xf32>
    %281 = arith.addf %280, %279 : vector<2x64xf32>
    %282 = arith.divf %280, %281 : vector<2x64xf32>
    %283 = vector.extract_strided_slice %282 {offsets = [0, 0], sizes = [2, 32], strides = [1, 1]} : vector<2x64xf32> to vector<2x32xf32>
    %284 = vector.extract_strided_slice %282 {offsets = [0, 32], sizes = [2, 32], strides = [1, 1]} : vector<2x64xf32> to vector<2x32xf32>
    %285 = vector.extract_strided_slice %271 {offsets = [0, 64], sizes = [2, 32], strides = [1, 1]} : vector<2x96xf32> to vector<2x32xf32>
    %286 = vector.extract_strided_slice %274 {offsets = [0, 64], sizes = [2, 32], strides = [1, 1]} : vector<2x96xf32> to vector<2x32xf32>
    %287 = arith.mulf %283, %286 : vector<2x32xf32>
    %288 = arith.addf %285, %287 : vector<2x32xf32>
    %289 = math.tanh %288 : vector<2x32xf32>
    %cst_54 = arith.constant 1.000000e+00 : f32
    %290 = vector.broadcast %cst_54 : f32 to vector<2x32xf32>
    %291 = arith.subf %290, %284 : vector<2x32xf32>
    %292 = arith.mulf %291, %289 : vector<2x32xf32>
    %293 = arith.mulf %284, %260 : vector<2x32xf32>
    %294 = arith.addf %292, %293 : vector<2x32xf32>
    %295 = vector.extract_strided_slice %89 {offsets = [0, 6, 0], sizes = [2, 1, 96], strides = [1, 1, 1]} : vector<2x8x96xf32> to vector<2x1x96xf32>
    %296 = vector.shape_cast %295 : vector<2x1x96xf32> to vector<2x96xf32>
    %297 = vector.extract_strided_slice %89 {offsets = [0, 1, 0], sizes = [2, 1, 96], strides = [1, 1, 1]} : vector<2x8x96xf32> to vector<2x1x96xf32>
    %298 = vector.shape_cast %297 : vector<2x1x96xf32> to vector<2x96xf32>
    %299 = vector.extract_strided_slice %296 {offsets = [0, 0], sizes = [2, 16], strides = [1, 1]} : vector<2x96xf32> to vector<2x16xf32>
    %300 = vector.extract_strided_slice %298 {offsets = [0, 16], sizes = [2, 16], strides = [1, 1]} : vector<2x96xf32> to vector<2x16xf32>
    %301 = vector.extract_strided_slice %296 {offsets = [0, 32], sizes = [2, 16], strides = [1, 1]} : vector<2x96xf32> to vector<2x16xf32>
    %302 = vector.extract_strided_slice %298 {offsets = [0, 48], sizes = [2, 16], strides = [1, 1]} : vector<2x96xf32> to vector<2x16xf32>
    %303 = vector.extract_strided_slice %296 {offsets = [0, 64], sizes = [2, 16], strides = [1, 1]} : vector<2x96xf32> to vector<2x16xf32>
    %304 = vector.extract_strided_slice %298 {offsets = [0, 80], sizes = [2, 16], strides = [1, 1]} : vector<2x96xf32> to vector<2x16xf32>
    %305 = tpu.concatenate %299, %300, %301, %302, %303, %304 in 1 : vector<2x16xf32>, vector<2x16xf32>, vector<2x16xf32>, vector<2x16xf32>, vector<2x16xf32>, vector<2x16xf32> -> vector<2x96xf32>
    %cst_55 = arith.constant dense<0.000000e+00> : vector<2x96xf32>
    %306 = tpu.matmul %294, %1, %cst_55 {dimension_numbers = #tpu.dot_dimension_numbers<[1], [0], [0], [1], [0, 0, 1, 1], [], []>} : vector<2x32xf32>, vector<32x96xf32>, vector<2x96xf32> -> vector<2x96xf32>
    %307 = vector.broadcast %3 : vector<1x96xf32> to vector<2x96xf32>
    %308 = arith.addf %306, %307 : vector<2x96xf32>
    %309 = vector.extract_strided_slice %305 {offsets = [0, 0], sizes = [2, 64], strides = [1, 1]} : vector<2x96xf32> to vector<2x64xf32>
    %310 = vector.extract_strided_slice %308 {offsets = [0, 0], sizes = [2, 64], strides = [1, 1]} : vector<2x96xf32> to vector<2x64xf32>
    %311 = arith.addf %309, %310 : vector<2x64xf32>
    %312 = arith.negf %311 : vector<2x64xf32>
    %313 = math.exp %312 : vector<2x64xf32>
    %cst_56 = arith.constant 1.000000e+00 : f32
    %314 = vector.broadcast %cst_56 : f32 to vector<2x64xf32>
    %315 = arith.addf %314, %313 : vector<2x64xf32>
    %316 = arith.divf %314, %315 : vector<2x64xf32>
    %317 = vector.extract_strided_slice %316 {offsets = [0, 0], sizes = [2, 32], strides = [1, 1]} : vector<2x64xf32> to vector<2x32xf32>
    %318 = vector.extract_strided_slice %316 {offsets = [0, 32], sizes = [2, 32], strides = [1, 1]} : vector<2x64xf32> to vector<2x32xf32>
    %319 = vector.extract_strided_slice %305 {offsets = [0, 64], sizes = [2, 32], strides = [1, 1]} : vector<2x96xf32> to vector<2x32xf32>
    %320 = vector.extract_strided_slice %308 {offsets = [0, 64], sizes = [2, 32], strides = [1, 1]} : vector<2x96xf32> to vector<2x32xf32>
    %321 = arith.mulf %317, %320 : vector<2x32xf32>
    %322 = arith.addf %319, %321 : vector<2x32xf32>
    %323 = math.tanh %322 : vector<2x32xf32>
    %cst_57 = arith.constant 1.000000e+00 : f32
    %324 = vector.broadcast %cst_57 : f32 to vector<2x32xf32>
    %325 = arith.subf %324, %318 : vector<2x32xf32>
    %326 = arith.mulf %325, %323 : vector<2x32xf32>
    %327 = arith.mulf %318, %294 : vector<2x32xf32>
    %328 = arith.addf %326, %327 : vector<2x32xf32>
    %329 = vector.extract_strided_slice %89 {offsets = [0, 7, 0], sizes = [2, 1, 96], strides = [1, 1, 1]} : vector<2x8x96xf32> to vector<2x1x96xf32>
    %330 = vector.shape_cast %329 : vector<2x1x96xf32> to vector<2x96xf32>
    %331 = vector.extract_strided_slice %89 {offsets = [0, 0, 0], sizes = [2, 1, 96], strides = [1, 1, 1]} : vector<2x8x96xf32> to vector<2x1x96xf32>
    %332 = vector.shape_cast %331 : vector<2x1x96xf32> to vector<2x96xf32>
    %333 = vector.extract_strided_slice %330 {offsets = [0, 0], sizes = [2, 16], strides = [1, 1]} : vector<2x96xf32> to vector<2x16xf32>
    %334 = vector.extract_strided_slice %332 {offsets = [0, 16], sizes = [2, 16], strides = [1, 1]} : vector<2x96xf32> to vector<2x16xf32>
    %335 = vector.extract_strided_slice %330 {offsets = [0, 32], sizes = [2, 16], strides = [1, 1]} : vector<2x96xf32> to vector<2x16xf32>
    %336 = vector.extract_strided_slice %332 {offsets = [0, 48], sizes = [2, 16], strides = [1, 1]} : vector<2x96xf32> to vector<2x16xf32>
    %337 = vector.extract_strided_slice %330 {offsets = [0, 64], sizes = [2, 16], strides = [1, 1]} : vector<2x96xf32> to vector<2x16xf32>
    %338 = vector.extract_strided_slice %332 {offsets = [0, 80], sizes = [2, 16], strides = [1, 1]} : vector<2x96xf32> to vector<2x16xf32>
    %339 = tpu.concatenate %333, %334, %335, %336, %337, %338 in 1 : vector<2x16xf32>, vector<2x16xf32>, vector<2x16xf32>, vector<2x16xf32>, vector<2x16xf32>, vector<2x16xf32> -> vector<2x96xf32>
    %cst_58 = arith.constant dense<0.000000e+00> : vector<2x96xf32>
    %340 = tpu.matmul %328, %1, %cst_58 {dimension_numbers = #tpu.dot_dimension_numbers<[1], [0], [0], [1], [0, 0, 1, 1], [], []>} : vector<2x32xf32>, vector<32x96xf32>, vector<2x96xf32> -> vector<2x96xf32>
    %341 = vector.broadcast %3 : vector<1x96xf32> to vector<2x96xf32>
    %342 = arith.addf %340, %341 : vector<2x96xf32>
    %343 = vector.extract_strided_slice %339 {offsets = [0, 0], sizes = [2, 64], strides = [1, 1]} : vector<2x96xf32> to vector<2x64xf32>
    %344 = vector.extract_strided_slice %342 {offsets = [0, 0], sizes = [2, 64], strides = [1, 1]} : vector<2x96xf32> to vector<2x64xf32>
    %345 = arith.addf %343, %344 : vector<2x64xf32>
    %346 = arith.negf %345 : vector<2x64xf32>
    %347 = math.exp %346 : vector<2x64xf32>
    %cst_59 = arith.constant 1.000000e+00 : f32
    %348 = vector.broadcast %cst_59 : f32 to vector<2x64xf32>
    %349 = arith.addf %348, %347 : vector<2x64xf32>
    %350 = arith.divf %348, %349 : vector<2x64xf32>
    %351 = vector.extract_strided_slice %350 {offsets = [0, 0], sizes = [2, 32], strides = [1, 1]} : vector<2x64xf32> to vector<2x32xf32>
    %352 = vector.extract_strided_slice %350 {offsets = [0, 32], sizes = [2, 32], strides = [1, 1]} : vector<2x64xf32> to vector<2x32xf32>
    %353 = vector.extract_strided_slice %339 {offsets = [0, 64], sizes = [2, 32], strides = [1, 1]} : vector<2x96xf32> to vector<2x32xf32>
    %354 = vector.extract_strided_slice %342 {offsets = [0, 64], sizes = [2, 32], strides = [1, 1]} : vector<2x96xf32> to vector<2x32xf32>
    %355 = arith.mulf %351, %354 : vector<2x32xf32>
    %356 = arith.addf %353, %355 : vector<2x32xf32>
    %357 = math.tanh %356 : vector<2x32xf32>
    %cst_60 = arith.constant 1.000000e+00 : f32
    %358 = vector.broadcast %cst_60 : f32 to vector<2x32xf32>
    %359 = arith.subf %358, %352 : vector<2x32xf32>
    %360 = arith.mulf %359, %357 : vector<2x32xf32>
    %361 = arith.mulf %352, %328 : vector<2x32xf32>
    %362 = arith.addf %360, %361 : vector<2x32xf32>
    %363 = vector.extract_strided_slice %124 {offsets = [0, 0], sizes = [2, 16], strides = [1, 1]} : vector<2x32xf32> to vector<2x16xf32>
    %364 = vector.extract_strided_slice %362 {offsets = [0, 16], sizes = [2, 16], strides = [1, 1]} : vector<2x32xf32> to vector<2x16xf32>
    %365 = tpu.concatenate %363, %364 in 1 : vector<2x16xf32>, vector<2x16xf32> -> vector<2x32xf32>
    %366 = vector.extract_strided_slice %158 {offsets = [0, 0], sizes = [2, 16], strides = [1, 1]} : vector<2x32xf32> to vector<2x16xf32>
    %367 = vector.extract_strided_slice %328 {offsets = [0, 16], sizes = [2, 16], strides = [1, 1]} : vector<2x32xf32> to vector<2x16xf32>
    %368 = tpu.concatenate %366, %367 in 1 : vector<2x16xf32>, vector<2x16xf32> -> vector<2x32xf32>
    %369 = vector.extract_strided_slice %192 {offsets = [0, 0], sizes = [2, 16], strides = [1, 1]} : vector<2x32xf32> to vector<2x16xf32>
    %370 = vector.extract_strided_slice %294 {offsets = [0, 16], sizes = [2, 16], strides = [1, 1]} : vector<2x32xf32> to vector<2x16xf32>
    %371 = tpu.concatenate %369, %370 in 1 : vector<2x16xf32>, vector<2x16xf32> -> vector<2x32xf32>
    %372 = vector.extract_strided_slice %226 {offsets = [0, 0], sizes = [2, 16], strides = [1, 1]} : vector<2x32xf32> to vector<2x16xf32>
    %373 = vector.extract_strided_slice %260 {offsets = [0, 16], sizes = [2, 16], strides = [1, 1]} : vector<2x32xf32> to vector<2x16xf32>
    %374 = tpu.concatenate %372, %373 in 1 : vector<2x16xf32>, vector<2x16xf32> -> vector<2x32xf32>
    %375 = vector.extract_strided_slice %260 {offsets = [0, 0], sizes = [2, 16], strides = [1, 1]} : vector<2x32xf32> to vector<2x16xf32>
    %376 = vector.extract_strided_slice %226 {offsets = [0, 16], sizes = [2, 16], strides = [1, 1]} : vector<2x32xf32> to vector<2x16xf32>
    %377 = tpu.concatenate %375, %376 in 1 : vector<2x16xf32>, vector<2x16xf32> -> vector<2x32xf32>
    %378 = vector.extract_strided_slice %294 {offsets = [0, 0], sizes = [2, 16], strides = [1, 1]} : vector<2x32xf32> to vector<2x16xf32>
    %379 = vector.extract_strided_slice %192 {offsets = [0, 16], sizes = [2, 16], strides = [1, 1]} : vector<2x32xf32> to vector<2x16xf32>
    %380 = tpu.concatenate %378, %379 in 1 : vector<2x16xf32>, vector<2x16xf32> -> vector<2x32xf32>
    %381 = vector.extract_strided_slice %328 {offsets = [0, 0], sizes = [2, 16], strides = [1, 1]} : vector<2x32xf32> to vector<2x16xf32>
    %382 = vector.extract_strided_slice %158 {offsets = [0, 16], sizes = [2, 16], strides = [1, 1]} : vector<2x32xf32> to vector<2x16xf32>
    %383 = tpu.concatenate %381, %382 in 1 : vector<2x16xf32>, vector<2x16xf32> -> vector<2x32xf32>
    %384 = vector.extract_strided_slice %362 {offsets = [0, 0], sizes = [2, 16], strides = [1, 1]} : vector<2x32xf32> to vector<2x16xf32>
    %385 = vector.extract_strided_slice %124 {offsets = [0, 16], sizes = [2, 16], strides = [1, 1]} : vector<2x32xf32> to vector<2x16xf32>
    %386 = tpu.concatenate %384, %385 in 1 : vector<2x16xf32>, vector<2x16xf32> -> vector<2x32xf32>
    %387 = vector.shape_cast %365 : vector<2x32xf32> to vector<1x2x32xf32>
    %388 = vector.shape_cast %368 : vector<2x32xf32> to vector<1x2x32xf32>
    %389 = vector.shape_cast %371 : vector<2x32xf32> to vector<1x2x32xf32>
    %390 = vector.shape_cast %374 : vector<2x32xf32> to vector<1x2x32xf32>
    %391 = vector.shape_cast %377 : vector<2x32xf32> to vector<1x2x32xf32>
    %392 = vector.shape_cast %380 : vector<2x32xf32> to vector<1x2x32xf32>
    %393 = vector.shape_cast %383 : vector<2x32xf32> to vector<1x2x32xf32>
    %394 = vector.shape_cast %386 : vector<2x32xf32> to vector<1x2x32xf32>
    %395 = tpu.concatenate %387, %388, %389, %390, %391, %392, %393, %394 in 0 : vector<1x2x32xf32>, vector<1x2x32xf32>, vector<1x2x32xf32>, vector<1x2x32xf32>, vector<1x2x32xf32>, vector<1x2x32xf32>, vector<1x2x32xf32>, vector<1x2x32xf32> -> vector<8x2x32xf32>
    %cst_61 = arith.constant dense<0.000000e+00> : vector<8x2xf32>
    %396 = vector.multi_reduction <add>, %395, %cst_61 [2] : vector<8x2x32xf32> to vector<8x2xf32>
    %397 = vector.shape_cast %396 : vector<8x2xf32> to vector<8x2x1xf32>
    %cst_62 = arith.constant dense<0.000000e+00> : vector<8x1xf32>
    %398 = vector.multi_reduction <add>, %397, %cst_62 [1] : vector<8x2x1xf32> to vector<8x1xf32>
    %399 = vector.shape_cast %398 : vector<8x1xf32> to vector<8x1x1xf32>
    %cst_63 = arith.constant 1.562500e-02 : f32
    %400 = vector.broadcast %cst_63 : f32 to vector<8x1x1xf32>
    %401 = arith.mulf %399, %400 : vector<8x1x1xf32>
    %402 = vector.broadcast %401 : vector<8x1x1xf32> to vector<8x2x32xf32>
    %403 = arith.subf %395, %402 : vector<8x2x32xf32>
    %404 = arith.mulf %403, %403 : vector<8x2x32xf32>
    %cst_64 = arith.constant dense<0.000000e+00> : vector<8x2xf32>
    %405 = vector.multi_reduction <add>, %404, %cst_64 [2] : vector<8x2x32xf32> to vector<8x2xf32>
    %406 = vector.shape_cast %405 : vector<8x2xf32> to vector<8x2x1xf32>
    %cst_65 = arith.constant dense<0.000000e+00> : vector<8x1xf32>
    %407 = vector.multi_reduction <add>, %406, %cst_65 [1] : vector<8x2x1xf32> to vector<8x1xf32>
    %408 = vector.shape_cast %407 : vector<8x1xf32> to vector<8x1x1xf32>
    %cst_66 = arith.constant 1.562500e-02 : f32
    %409 = vector.broadcast %cst_66 : f32 to vector<8x1x1xf32>
    %410 = arith.mulf %408, %409 : vector<8x1x1xf32>
    %cst_67 = arith.constant 9.99999974E-6 : f32
    %411 = vector.broadcast %cst_67 : f32 to vector<8x1x1xf32>
    %412 = arith.addf %410, %411 : vector<8x1x1xf32>
    %413 = math.rsqrt %412 : vector<8x1x1xf32>
    %414 = vector.broadcast %413 : vector<8x1x1xf32> to vector<8x2x32xf32>
    %415 = arith.mulf %403, %414 : vector<8x2x32xf32>
    %c0_68 = arith.constant 0 : index
    %c0_69 = arith.constant 0 : index
    %c0_70 = arith.constant 0 : index
    %416 = vector.load %arg4[%c0_68, %c0_69, %c0_70] : memref<8x2x32xf32, #tpu.memory_space<vmem>>, vector<8x2x32xf32>
    tpu.vector_store %arg4[%c0_68, %c0_69, %c0_70], %415 {strides = array<i32>} : memref<8x2x32xf32, #tpu.memory_space<vmem>>, vector<8x2x32xf32>,
    return
  }
}

</mosaic_0001>

<llo_original>
// kernel: stdcn_with_gru_pallas.1
$region0: #{stdcn_with_gru_pallas.1}
  #allocation0 [shape = 'u32[]', space=smem, size = 0x4, offset = 0x4, fixed_abs, tag = 'smem constant byte address 0x4 - core index']
  #allocation1 [shape = 'u32[144,128]{1,0:T(1,128)}', space=vmem, size = 0x12000, scoped, tag = 'internal scratch']
  %s0 = inlined_call_operand.vmem [shape: f32[4], index: 0, kind: input, shape index: {}]
  %s1 = inlined_call_operand.vmem [shape: f32[2,8,8], index: 1, kind: input, shape index: {}]
  %s2 = inlined_call_operand.vmem [shape: f32[2,3,8,8], index: 2, kind: input, shape index: {}]
  %s3 = inlined_call_operand.vmem [shape: f32[42,96], index: 3, kind: input, shape index: {}]
  %s4 = inlined_call_operand.vmem [shape: f32[8,2,32], index: 4, kind: output, shape index: {}]
  %s5 = sld [smem:[#allocation0]]
  $region30: #{stdcn_with_gru_pallas.1} parent=0
    _
  %s7 = ssub.s32 1, %s5
  %s8 = scalar_select 0, %s7, %s5
  $region1: #{stdcn_with_gru_pallas.1} parent=0
    #allocation2 [shape = 'u8[512]{0}', space=smem, size = 0x200, scoped, tag = 'input window, operand 0, single buffered']
    #allocation3 [shape = 's32[1]{0}', space=sflag, size = 0x4, scoped, tag = 'scoped memory for stdcn_with_gru_pallas.1']
    %9 = vsyncpa [#allocation3], 0
    // Predicated region
    $region2: #{stdcn_with_gru_pallas.1} parent=1 // pred_check
      _
    $region3: #{stdcn_with_gru_pallas.1} parent=1 // pred_check_branch
      %11 = sbr.rel (0) target = $region5
    $region4: #{stdcn_with_gru_pallas.1} parent=1 // pred_region
      %s13 = ssub.s32 16, 16
      %14 = vsyncadd [#allocation3], %s13
      %s16 = sshll.u32 %s0, 4
      %s17 = int_to_ptr.vmem [resolvable:$true] %s16
      %19 = dma.vmem_to_smem %s17, 16, [#allocation2], [#allocation3]
    $region5: #{stdcn_with_gru_pallas.1} parent=1 // pred_fallthru
      _
    // Predicated region
    $region6: #{stdcn_with_gru_pallas.1} parent=1 // pred_check
      _
    $region7: #{stdcn_with_gru_pallas.1} parent=1 // pred_check_branch
      %21 = sbr.rel (0) target = $region9
    $region8: #{stdcn_with_gru_pallas.1} parent=1 // pred_region
      _
    $region9: #{stdcn_with_gru_pallas.1} parent=1 // pred_fallthru
      _
    // Predicated region
    $region10: #{stdcn_with_gru_pallas.1} parent=1 // pred_check
      _
    $region11: #{stdcn_with_gru_pallas.1} parent=1 // pred_check_branch
      %23 = sbr.rel (0) target = $region13
    $region12: #{stdcn_with_gru_pallas.1} parent=1 // pred_region
      _
    $region13: #{stdcn_with_gru_pallas.1} parent=1 // pred_fallthru
      _
    // Predicated region
    $region14: #{stdcn_with_gru_pallas.1} parent=1 // pred_check
      _
    $region15: #{stdcn_with_gru_pallas.1} parent=1 // pred_check_branch
      %25 = sbr.rel (0) target = $region17
    $region16: #{stdcn_with_gru_pallas.1} parent=1 // pred_region
      _
    $region17: #{stdcn_with_gru_pallas.1} parent=1 // pred_fallthru
      _
    // Predicated region
    $region18: #{stdcn_with_gru_pallas.1} parent=1 // pred_check
      _
    $region19: #{stdcn_with_gru_pallas.1} parent=1 // pred_check_branch
      %27 = sbr.rel (0) target = $region21
    $region20: #{stdcn_with_gru_pallas.1} parent=1 // pred_region
      %28 = dma.done [#allocation3], 16
    $region21: #{stdcn_with_gru_pallas.1} parent=1 // pred_fallthru
      _
    %29 = sfence
    %v30 = vld [vmem:[%s3] sm:$0xff]
    %v31 = vld [vmem:[%s3 + $0x8] sm:$0xff]
    %v32 = vld [vmem:[%s3 + $0x10] sm:$0xff]
    %v33 = vld [vmem:[%s3 + $0x18] sm:$0xff]
    %v34 = vld [vmem:[%s3 + $0x20] sm:$0xff]
    %v35 = vld [vmem:[%s3 + $0x28] sm:$0x1]
    %v36 = vld [vmem:[%s3 + $0x29] sm:$0x1]
    %s37 = sld [smem:[#allocation2 + $0x3]]
    %v38 = vld [vmem:[%s1] sm:$0xff]
    %v39 = vld [vmem:[%s1 + $0x8] sm:$0xff]
    %v40 = vlaneseq
    %v41 = vshrl.u32 %v40, 7
    %v42 = vlaneseq
    %v43 = vand.u32 %v42, 127
    %vm44 = vcmp.eq.s32.totalorder %v41, %v43
    %v45 = vld [vmem:[%s2] sm:$0xff]
    %v46 = vld [vmem:[%s2 + $0x18] sm:$0xff]
    %v47 = vsel %vm44, 1, 0
    %vm48 = vcmp.eq.s32.totalorder %v47, 1
    %v49 = vsel %vm48, 1.0, %v45
    %v50 = vsel %vm48, 1.0, %v46
    %vm51 = vcmask 64512
    %v52 = vsel %vm51, %v49, 0.0
    %53 = vadd.xlane.f32.xlu0 %v52
    %v54 = vpop.xlane.xlu0 %53
    %v55 = vsel %vm51, %v50, 0.0
    %56 = vadd.xlane.f32.xlu0 %v55
    %v57 = vpop.xlane.xlu0 %56
    %v58 = vrsqrt.pop %v54
    %v59 = vrsqrt.pop %v57
    %v62 = vlaneseq
    %v63 = vshrl.u32 %v62, 7
    %v64 = vsub.s32 %v43, %v63
    %v65 = vrot.slane %v58, %v64
    %v66 = vlaneseq
    %v67 = vshrl.u32 %v66, 7
    %v68 = vsub.s32 %v43, %v67
    %v69 = vrot.slane %v59, %v68
    %vm70 = vcmask 1041409
    %vm71 = vcmask 1042434
    %v72 = vsel %vm71, %v65, %v65
    %vm73 = vcmask 1043459
    %v74 = vsel %vm73, %v65, %v72
    %vm75 = vcmask 1044484
    %v76 = vsel %vm75, %v65, %v74
    %vm77 = vcmask 1045509
    %v78 = vsel %vm77, %v65, %v76
    %vm79 = vcmask 1046534
    %v80 = vsel %vm79, %v65, %v78
    %vm81 = vcmask 1047559
    %v82 = vsel %vm81, %v65, %v80
    %v83 = vsel %vm71, %v69, %v69
    %v84 = vsel %vm73, %v69, %v83
    %v85 = vsel %vm75, %v69, %v84
    %v86 = vsel %vm77, %v69, %v85
    %v87 = vsel %vm79, %v69, %v86
    %v88 = vsel %vm81, %v69, %v87
    %v91 = vmul.f32 %v38, %v82
    %v92 = vmul.f32 %v39, %v88
    %v94 = vsel %vm51, %v91, 0
    %v97 = vsel %vm51, %v49, 0
    %99 = vmatprep.subr.mxu0 0.0
    %100 = vmatpush1.xpose.msra.mxu0 %v97
    %101 = vmatprep.subr.mxu0 0.0
    %102 = vmatpush1.xpose.msra.mxu0 0.0
    %103 = vmatprep.subr.mxu0 0.0
    %104 = vmatpush1.xpose.msra.mxu0 0.0
    %105 = vmatprep.subr.mxu0 0.0
    %106 = vmatpush1.xpose.msra.mxu0 0.0
    %107 = vmatprep.subr.mxu0 0.0
    %108 = vmatpush1.xpose.msra.mxu0 0.0
    %109 = vmatprep.subr.mxu0 0.0
    %110 = vmatpush1.xpose.msra.mxu0 0.0
    %111 = vmatprep.subr.mxu0 0.0
    %112 = vmatpush1.xpose.msra.mxu0 0.0
    %113 = vmatprep.subr.mxu0 0.0
    %114 = vmatpush1.xpose.msra.mxu0 0.0
    %115 = vmatprep.subr.mxu0 0.0
    %116 = vmatpush1.xpose.msra.mxu0 0.0
    %117 = vmatprep.subr.mxu0 0.0
    %118 = vmatpush1.xpose.msra.mxu0 0.0
    %119 = vmatprep.subr.mxu0 0.0
    %120 = vmatpush1.xpose.msra.mxu0 0.0
    %121 = vmatprep.subr.mxu0 0.0
    %122 = vmatpush1.xpose.msra.mxu0 0.0
    %123 = vmatprep.subr.mxu0 0.0
    %124 = vmatpush1.xpose.msra.mxu0 0.0
    %125 = vmatprep.subr.mxu0 0.0
    %126 = vmatpush1.xpose.msra.mxu0 0.0
    %127 = vmatprep.subr.mxu0 0.0
    %128 = vmatpush1.xpose.msra.mxu0 0.0
    %129 = vmatprep.subr.mxu0 0.0
    %130 = vmatpush1.xpose.msra.mxu0 0.0
    %131 = vmatprep.subr.mxu0 0.0
    %132 = vmatpush1.xpose.msra.mxu0 0.0
    %133 = vmatprep.subr.mxu0 0.0
    %134 = vmatpush1.xpose.msra.mxu0 0.0
    %135 = vmatprep.subr.mxu0 0.0
    %136 = vmatpush1.xpose.msra.mxu0 0.0
    %137 = vmatprep.subr.mxu0 0.0
    %138 = vmatpush1.xpose.msra.mxu0 0.0
    %139 = vmatprep.subr.mxu0 0.0
    %140 = vmatpush1.xpose.msra.mxu0 0.0
    %141 = vmatprep.subr.mxu0 0.0
    %142 = vmatpush1.xpose.msra.mxu0 0.0
    %143 = vmatprep.subr.mxu0 0.0
    %144 = vmatpush1.xpose.msra.mxu0 0.0
    %145 = vmatprep.subr.mxu0 0.0
    %146 = vmatpush1.xpose.msra.mxu0 0.0
    %147 = vmatprep.subr.mxu0 0.0
    %148 = vmatpush1.xpose.msra.mxu0 0.0
    %149 = vmatprep.subr.mxu0 0.0
    %150 = vmatpush1.xpose.msra.mxu0 0.0
    %151 = vmatprep.subr.mxu0 0.0
    %152 = vmatpush1.xpose.msra.mxu0 0.0
    %153 = vmatprep.subr.mxu0 0.0
    %154 = vmatpush1.xpose.msra.mxu0 0.0
    %155 = vmatprep.subr.mxu0 0.0
    %156 = vmatpush1.xpose.msra.mxu0 0.0
    %157 = vmatprep.subr.mxu0 0.0
    %158 = vmatpush1.xpose.msra.mxu0 0.0
    %159 = vmatprep.subr.mxu0 0.0
    %160 = vmatpush1.xpose.msra.mxu0 0.0
    %161 = vmatprep.subr.mxu0 0.0
    %162 = vmatpush1.xpose.msra.mxu0 0.0
    %163 = vmatprep.mubr.f32.mxu0 0.0
    %164 = vmatmul.mubr.f32.gmra.mrb[0].mxu0 %v94
    %v165 = vpop.f32.mrb[0].mxu0
    %v166 = vadd.f32 0.0, %v165
    %v167 = vpop.f32.mrb[0].mxu0
    %168 = vdwg.mxu0
    %v170 = vsel %vm51, %v92, 0
    %v173 = vsel %vm51, %v50, 0
    %175 = vmatprep.subr.mxu0 0.0
    %176 = vmatpush1.xpose.msra.mxu0 %v173
    %177 = vmatprep.subr.mxu0 0.0
    %178 = vmatpush1.xpose.msra.mxu0 0.0
    %179 = vmatprep.subr.mxu0 0.0
    %180 = vmatpush1.xpose.msra.mxu0 0.0
    %181 = vmatprep.subr.mxu0 0.0
    %182 = vmatpush1.xpose.msra.mxu0 0.0
    %183 = vmatprep.subr.mxu0 0.0
    %184 = vmatpush1.xpose.msra.mxu0 0.0
    %185 = vmatprep.subr.mxu0 0.0
    %186 = vmatpush1.xpose.msra.mxu0 0.0
    %187 = vmatprep.subr.mxu0 0.0
    %188 = vmatpush1.xpose.msra.mxu0 0.0
    %189 = vmatprep.subr.mxu0 0.0
    %190 = vmatpush1.xpose.msra.mxu0 0.0
    %191 = vmatprep.subr.mxu0 0.0
    %192 = vmatpush1.xpose.msra.mxu0 0.0
    %193 = vmatprep.subr.mxu0 0.0
    %194 = vmatpush1.xpose.msra.mxu0 0.0
    %195 = vmatprep.subr.mxu0 0.0
    %196 = vmatpush1.xpose.msra.mxu0 0.0
    %197 = vmatprep.subr.mxu0 0.0
    %198 = vmatpush1.xpose.msra.mxu0 0.0
    %199 = vmatprep.subr.mxu0 0.0
    %200 = vmatpush1.xpose.msra.mxu0 0.0
    %201 = vmatprep.subr.mxu0 0.0
    %202 = vmatpush1.xpose.msra.mxu0 0.0
    %203 = vmatprep.subr.mxu0 0.0
    %204 = vmatpush1.xpose.msra.mxu0 0.0
    %205 = vmatprep.subr.mxu0 0.0
    %206 = vmatpush1.xpose.msra.mxu0 0.0
    %207 = vmatprep.subr.mxu0 0.0
    %208 = vmatpush1.xpose.msra.mxu0 0.0
    %209 = vmatprep.subr.mxu0 0.0
    %210 = vmatpush1.xpose.msra.mxu0 0.0
    %211 = vmatprep.subr.mxu0 0.0
    %212 = vmatpush1.xpose.msra.mxu0 0.0
    %213 = vmatprep.subr.mxu0 0.0
    %214 = vmatpush1.xpose.msra.mxu0 0.0
    %215 = vmatprep.subr.mxu0 0.0
    %216 = vmatpush1.xpose.msra.mxu0 0.0
    %217 = vmatprep.subr.mxu0 0.0
    %218 = vmatpush1.xpose.msra.mxu0 0.0
    %219 = vmatprep.subr.mxu0 0.0
    %220 = vmatpush1.xpose.msra.mxu0 0.0
    %221 = vmatprep.subr.mxu0 0.0
    %222 = vmatpush1.xpose.msra.mxu0 0.0
    %223 = vmatprep.subr.mxu0 0.0
    %224 = vmatpush1.xpose.msra.mxu0 0.0
    %225 = vmatprep.subr.mxu0 0.0
    %226 = vmatpush1.xpose.msra.mxu0 0.0
    %227 = vmatprep.subr.mxu0 0.0
    %228 = vmatpush1.xpose.msra.mxu0 0.0
    %229 = vmatprep.subr.mxu0 0.0
    %230 = vmatpush1.xpose.msra.mxu0 0.0
    %231 = vmatprep.subr.mxu0 0.0
    %232 = vmatpush1.xpose.msra.mxu0 0.0
    %233 = vmatprep.subr.mxu0 0.0
    %234 = vmatpush1.xpose.msra.mxu0 0.0
    %235 = vmatprep.subr.mxu0 0.0
    %236 = vmatpush1.xpose.msra.mxu0 0.0
    %237 = vmatprep.subr.mxu0 0.0
    %238 = vmatpush1.xpose.msra.mxu0 0.0
    %239 = vmatprep.mubr.f32.mxu0 0.0
    %240 = vmatmul.mubr.f32.gmra.mrb[0].mxu0 %v170
    %v241 = vpop.f32.mrb[0].mxu0
    %v242 = vadd.f32 0.0, %v241
    %v243 = vpop.f32.mrb[0].mxu0
    %244 = vdwg.mxu0
    %v245 = vstv %s37
    %v246 = vmul.f32 %v58, %v245
    %v247 = vmul.f32 %v59, %v245
    %v250 = vlaneseq
    %v251 = vshrl.u32 %v250, 7
    %v252 = vsub.s32 %v43, %v251
    %v253 = vrot.slane %v246, %v252
    %v254 = vlaneseq
    %v255 = vshrl.u32 %v254, 7
    %v256 = vsub.s32 %v43, %v255
    %v257 = vrot.slane %v247, %v256
    %v258 = vsel %vm71, %v253, %v253
    %v259 = vsel %vm73, %v253, %v258
    %v260 = vsel %vm75, %v253, %v259
    %v261 = vsel %vm77, %v253, %v260
    %v262 = vsel %vm79, %v253, %v261
    %v263 = vsel %vm81, %v253, %v262
    %v264 = vsel %vm71, %v257, %v257
    %v265 = vsel %vm73, %v257, %v264
    %v266 = vsel %vm75, %v257, %v265
    %v267 = vsel %vm77, %v257, %v266
    %v268 = vsel %vm79, %v257, %v267
    %v269 = vsel %vm81, %v257, %v268
    %v272 = vmul.f32 %v166, %v263
    %v273 = vmul.f32 %v242, %v269
    %vm274 = vcmp.ge.f32.partialorder %v272, 0.0
    %vm275 = vcmp.ge.f32.partialorder %v273, 0.0
    %v276 = vmul.f32 %v272, 0.01
    %v277 = vmul.f32 %v273, 0.01
    %v278 = vsel %vm274, %v272, %v276
    %v279 = vsel %vm275, %v273, %v277
    %s280 = sld [smem:[#allocation2]]
    %v281 = vstv %s280
    %v282 = vmul.f32 %v278, %v281
    %v283 = vmul.f32 %v279, %v281
    %v284 = vadd.f32 %v282, 0.0
    %v285 = vadd.f32 %v283, 0.0
    %s286 = scalar_lea.vmem %s2, 8
    %v287 = vld [vmem:[%s286] sm:$0xff]
    %v288 = vld [vmem:[%s286 + $0x18] sm:$0xff]
    %v289 = vsel %vm48, 1.0, %v287
    %v290 = vsel %vm48, 1.0, %v288
    %v291 = vsel %vm51, %v289, 0.0
    %292 = vadd.xlane.f32.xlu0 %v291
    %v293 = vpop.xlane.xlu0 %292
    %v294 = vsel %vm51, %v290, 0.0
    %295 = vadd.xlane.f32.xlu0 %v294
    %v296 = vpop.xlane.xlu0 %295
    %v297 = vrsqrt.pop %v293
    %v298 = vrsqrt.pop %v296
    %v301 = vlaneseq
    %v302 = vshrl.u32 %v301, 7
    %v303 = vsub.s32 %v43, %v302
    %v304 = vrot.slane %v297, %v303
    %v305 = vlaneseq
    %v306 = vshrl.u32 %v305, 7
    %v307 = vsub.s32 %v43, %v306
    %v308 = vrot.slane %v298, %v307
    %v309 = vsel %vm71, %v304, %v304
    %v310 = vsel %vm73, %v304, %v309
    %v311 = vsel %vm75, %v304, %v310
    %v312 = vsel %vm77, %v304, %v311
    %v313 = vsel %vm79, %v304, %v312
    %v314 = vsel %vm81, %v304, %v313
    %v315 = vsel %vm71, %v308, %v308
    %v316 = vsel %vm73, %v308, %v315
    %v317 = vsel %vm75, %v308, %v316
    %v318 = vsel %vm77, %v308, %v317
    %v319 = vsel %vm79, %v308, %v318
    %v320 = vsel %vm81, %v308, %v319
    %v323 = vmul.f32 %v38, %v314
    %v324 = vmul.f32 %v39, %v320
    %v326 = vsel %vm51, %v323, 0
    %v329 = vsel %vm51, %v289, 0
    %331 = vmatprep.subr.mxu0 0.0
    %332 = vmatpush1.xpose.msra.mxu0 %v329
    %333 = vmatprep.subr.mxu0 0.0
    %334 = vmatpush1.xpose.msra.mxu0 0.0
    %335 = vmatprep.subr.mxu0 0.0
    %336 = vmatpush1.xpose.msra.mxu0 0.0
    %337 = vmatprep.subr.mxu0 0.0
    %338 = vmatpush1.xpose.msra.mxu0 0.0
    %339 = vmatprep.subr.mxu0 0.0
    %340 = vmatpush1.xpose.msra.mxu0 0.0
    %341 = vmatprep.subr.mxu0 0.0
    %342 = vmatpush1.xpose.msra.mxu0 0.0
    %343 = vmatprep.subr.mxu0 0.0
    %344 = vmatpush1.xpose.msra.mxu0 0.0
    %345 = vmatprep.subr.mxu0 0.0
    %346 = vmatpush1.xpose.msra.mxu0 0.0
    %347 = vmatprep.subr.mxu0 0.0
    %348 = vmatpush1.xpose.msra.mxu0 0.0
    %349 = vmatprep.subr.mxu0 0.0
    %350 = vmatpush1.xpose.msra.mxu0 0.0
    %351 = vmatprep.subr.mxu0 0.0
    %352 = vmatpush1.xpose.msra.mxu0 0.0
    %353 = vmatprep.subr.mxu0 0.0
    %354 = vmatpush1.xpose.msra.mxu0 0.0
    %355 = vmatprep.subr.mxu0 0.0
    %356 = vmatpush1.xpose.msra.mxu0 0.0
    %357 = vmatprep.subr.mxu0 0.0
    %358 = vmatpush1.xpose.msra.mxu0 0.0
    %359 = vmatprep.subr.mxu0 0.0
    %360 = vmatpush1.xpose.msra.mxu0 0.0
    %361 = vmatprep.subr.mxu0 0.0
    %362 = vmatpush1.xpose.msra.mxu0 0.0
    %363 = vmatprep.subr.mxu0 0.0
    %364 = vmatpush1.xpose.msra.mxu0 0.0
    %365 = vmatprep.subr.mxu0 0.0
    %366 = vmatpush1.xpose.msra.mxu0 0.0
    %367 = vmatprep.subr.mxu0 0.0
    %368 = vmatpush1.xpose.msra.mxu0 0.0
    %369 = vmatprep.subr.mxu0 0.0
    %370 = vmatpush1.xpose.msra.mxu0 0.0
    %371 = vmatprep.subr.mxu0 0.0
    %372 = vmatpush1.xpose.msra.mxu0 0.0
    %373 = vmatprep.subr.mxu0 0.0
    %374 = vmatpush1.xpose.msra.mxu0 0.0
    %375 = vmatprep.subr.mxu0 0.0
    %376 = vmatpush1.xpose.msra.mxu0 0.0
    %377 = vmatprep.subr.mxu0 0.0
    %378 = vmatpush1.xpose.msra.mxu0 0.0
    %379 = vmatprep.subr.mxu0 0.0
    %380 = vmatpush1.xpose.msra.mxu0 0.0
    %381 = vmatprep.subr.mxu0 0.0
    %382 = vmatpush1.xpose.msra.mxu0 0.0
    %383 = vmatprep.subr.mxu0 0.0
    %384 = vmatpush1.xpose.msra.mxu0 0.0
    %385 = vmatprep.subr.mxu0 0.0
    %386 = vmatpush1.xpose.msra.mxu0 0.0
    %387 = vmatprep.subr.mxu0 0.0
    %388 = vmatpush1.xpose.msra.mxu0 0.0
    %389 = vmatprep.subr.mxu0 0.0
    %390 = vmatpush1.xpose.msra.mxu0 0.0
    %391 = vmatprep.subr.mxu0 0.0
    %392 = vmatpush1.xpose.msra.mxu0 0.0
    %393 = vmatprep.subr.mxu0 0.0
    %394 = vmatpush1.xpose.msra.mxu0 0.0
    %395 = vmatprep.mubr.f32.mxu0 0.0
    %396 = vmatmul.mubr.f32.gmra.mrb[0].mxu0 %v326
    %v397 = vpop.f32.mrb[0].mxu0
    %v398 = vadd.f32 0.0, %v397
    %v399 = vpop.f32.mrb[0].mxu0
    %400 = vdwg.mxu0
    %v402 = vsel %vm51, %v324, 0
    %v405 = vsel %vm51, %v290, 0
    %407 = vmatprep.subr.mxu0 0.0
    %408 = vmatpush1.xpose.msra.mxu0 %v405
    %409 = vmatprep.subr.mxu0 0.0
    %410 = vmatpush1.xpose.msra.mxu0 0.0
    %411 = vmatprep.subr.mxu0 0.0
    %412 = vmatpush1.xpose.msra.mxu0 0.0
    %413 = vmatprep.subr.mxu0 0.0
    %414 = vmatpush1.xpose.msra.mxu0 0.0
    %415 = vmatprep.subr.mxu0 0.0
    %416 = vmatpush1.xpose.msra.mxu0 0.0
    %417 = vmatprep.subr.mxu0 0.0
    %418 = vmatpush1.xpose.msra.mxu0 0.0
    %419 = vmatprep.subr.mxu0 0.0
    %420 = vmatpush1.xpose.msra.mxu0 0.0
    %421 = vmatprep.subr.mxu0 0.0
    %422 = vmatpush1.xpose.msra.mxu0 0.0
    %423 = vmatprep.subr.mxu0 0.0
    %424 = vmatpush1.xpose.msra.mxu0 0.0
    %425 = vmatprep.subr.mxu0 0.0
    %426 = vmatpush1.xpose.msra.mxu0 0.0
    %427 = vmatprep.subr.mxu0 0.0
    %428 = vmatpush1.xpose.msra.mxu0 0.0
    %429 = vmatprep.subr.mxu0 0.0
    %430 = vmatpush1.xpose.msra.mxu0 0.0
    %431 = vmatprep.subr.mxu0 0.0
    %432 = vmatpush1.xpose.msra.mxu0 0.0
    %433 = vmatprep.subr.mxu0 0.0
    %434 = vmatpush1.xpose.msra.mxu0 0.0
    %435 = vmatprep.subr.mxu0 0.0
    %436 = vmatpush1.xpose.msra.mxu0 0.0
    %437 = vmatprep.subr.mxu0 0.0
    %438 = vmatpush1.xpose.msra.mxu0 0.0
    %439 = vmatprep.subr.mxu0 0.0
    %440 = vmatpush1.xpose.msra.mxu0 0.0
    %441 = vmatprep.subr.mxu0 0.0
    %442 = vmatpush1.xpose.msra.mxu0 0.0
    %443 = vmatprep.subr.mxu0 0.0
    %444 = vmatpush1.xpose.msra.mxu0 0.0
    %445 = vmatprep.subr.mxu0 0.0
    %446 = vmatpush1.xpose.msra.mxu0 0.0
    %447 = vmatprep.subr.mxu0 0.0
    %448 = vmatpush1.xpose.msra.mxu0 0.0
    %449 = vmatprep.subr.mxu0 0.0
    %450 = vmatpush1.xpose.msra.mxu0 0.0
    %451 = vmatprep.subr.mxu0 0.0
    %452 = vmatpush1.xpose.msra.mxu0 0.0
    %453 = vmatprep.subr.mxu0 0.0
    %454 = vmatpush1.xpose.msra.mxu0 0.0
    %455 = vmatprep.subr.mxu0 0.0
    %456 = vmatpush1.xpose.msra.mxu0 0.0
    %457 = vmatprep.subr.mxu0 0.0
    %458 = vmatpush1.xpose.msra.mxu0 0.0
    %459 = vmatprep.subr.mxu0 0.0
    %460 = vmatpush1.xpose.msra.mxu0 0.0
    %461 = vmatprep.subr.mxu0 0.0
    %462 = vmatpush1.xpose.msra.mxu0 0.0
    %463 = vmatprep.subr.mxu0 0.0
    %464 = vmatpush1.xpose.msra.mxu0 0.0
    %465 = vmatprep.subr.mxu0 0.0
    %466 = vmatpush1.xpose.msra.mxu0 0.0
    %467 = vmatprep.subr.mxu0 0.0
    %468 = vmatpush1.xpose.msra.mxu0 0.0
    %469 = vmatprep.subr.mxu0 0.0
    %470 = vmatpush1.xpose.msra.mxu0 0.0
    %471 = vmatprep.mubr.f32.mxu0 0.0
    %472 = vmatmul.mubr.f32.gmra.mrb[0].mxu0 %v402
    %v473 = vpop.f32.mrb[0].mxu0
    %v474 = vadd.f32 0.0, %v473
    %v475 = vpop.f32.mrb[0].mxu0
    %476 = vdwg.mxu0
    %v477 = vmul.f32 %v297, %v245
    %v478 = vmul.f32 %v298, %v245
    %v481 = vlaneseq
    %v482 = vshrl.u32 %v481, 7
    %v483 = vsub.s32 %v43, %v482
    %v484 = vrot.slane %v477, %v483
    %v485 = vlaneseq
    %v486 = vshrl.u32 %v485, 7
    %v487 = vsub.s32 %v43, %v486
    %v488 = vrot.slane %v478, %v487
    %v489 = vsel %vm71, %v484, %v484
    %v490 = vsel %vm73, %v484, %v489
    %v491 = vsel %vm75, %v484, %v490
    %v492 = vsel %vm77, %v484, %v491
    %v493 = vsel %vm79, %v484, %v492
    %v494 = vsel %vm81, %v484, %v493
    %v495 = vsel %vm71, %v488, %v488
    %v496 = vsel %vm73, %v488, %v495
    %v497 = vsel %vm75, %v488, %v496
    %v498 = vsel %vm77, %v488, %v497
    %v499 = vsel %vm79, %v488, %v498
    %v500 = vsel %vm81, %v488, %v499
    %v503 = vmul.f32 %v398, %v494
    %v504 = vmul.f32 %v474, %v500
    %vm505 = vcmp.ge.f32.partialorder %v503, 0.0
    %vm506 = vcmp.ge.f32.partialorder %v504, 0.0
    %v507 = vmul.f32 %v503, 0.01
    %v508 = vmul.f32 %v504, 0.01
    %v509 = vsel %vm505, %v503, %v507
    %v510 = vsel %vm506, %v504, %v508
    %s511 = sld [smem:[#allocation2 + $0x1]]
    %v512 = vstv %s511
    %v513 = vmul.f32 %v509, %v512
    %v514 = vmul.f32 %v510, %v512
    %v515 = vadd.f32 %v284, %v513
    %v516 = vadd.f32 %v285, %v514
    %s517 = scalar_lea.vmem %s2, 16
    %v518 = vld [vmem:[%s517] sm:$0xff]
    %v519 = vld [vmem:[%s517 + $0x18] sm:$0xff]
    %v520 = vsel %vm48, 1.0, %v518
    %v521 = vsel %vm48, 1.0, %v519
    %v522 = vsel %vm51, %v520, 0.0
    %523 = vadd.xlane.f32.xlu0 %v522
    %v524 = vpop.xlane.xlu0 %523
    %v525 = vsel %vm51, %v521, 0.0
    %526 = vadd.xlane.f32.xlu0 %v525
    %v527 = vpop.xlane.xlu0 %526
    %v528 = vrsqrt.pop %v524
    %v529 = vrsqrt.pop %v527
    %v532 = vlaneseq
    %v533 = vshrl.u32 %v532, 7
    %v534 = vsub.s32 %v43, %v533
    %v535 = vrot.slane %v528, %v534
    %v536 = vlaneseq
    %v537 = vshrl.u32 %v536, 7
    %v538 = vsub.s32 %v43, %v537
    %v539 = vrot.slane %v529, %v538
    %v540 = vsel %vm71, %v535, %v535
    %v541 = vsel %vm73, %v535, %v540
    %v542 = vsel %vm75, %v535, %v541
    %v543 = vsel %vm77, %v535, %v542
    %v544 = vsel %vm79, %v535, %v543
    %v545 = vsel %vm81, %v535, %v544
    %v546 = vsel %vm71, %v539, %v539
    %v547 = vsel %vm73, %v539, %v546
    %v548 = vsel %vm75, %v539, %v547
    %v549 = vsel %vm77, %v539, %v548
    %v550 = vsel %vm79, %v539, %v549
    %v551 = vsel %vm81, %v539, %v550
    %v554 = vmul.f32 %v38, %v545
    %v555 = vmul.f32 %v39, %v551
    %v557 = vsel %vm51, %v554, 0
    %v560 = vsel %vm51, %v520, 0
    %562 = vmatprep.subr.mxu0 0.0
    %563 = vmatpush1.xpose.msra.mxu0 %v560
    %564 = vmatprep.subr.mxu0 0.0
    %565 = vmatpush1.xpose.msra.mxu0 0.0
    %566 = vmatprep.subr.mxu0 0.0
    %567 = vmatpush1.xpose.msra.mxu0 0.0
    %568 = vmatprep.subr.mxu0 0.0
    %569 = vmatpush1.xpose.msra.mxu0 0.0
    %570 = vmatprep.subr.mxu0 0.0
    %571 = vmatpush1.xpose.msra.mxu0 0.0
    %572 = vmatprep.subr.mxu0 0.0
    %573 = vmatpush1.xpose.msra.mxu0 0.0
    %574 = vmatprep.subr.mxu0 0.0
    %575 = vmatpush1.xpose.msra.mxu0 0.0
    %576 = vmatprep.subr.mxu0 0.0
    %577 = vmatpush1.xpose.msra.mxu0 0.0
    %578 = vmatprep.subr.mxu0 0.0
    %579 = vmatpush1.xpose.msra.mxu0 0.0
    %580 = vmatprep.subr.mxu0 0.0
    %581 = vmatpush1.xpose.msra.mxu0 0.0
    %582 = vmatprep.subr.mxu0 0.0
    %583 = vmatpush1.xpose.msra.mxu0 0.0
    %584 = vmatprep.subr.mxu0 0.0
    %585 = vmatpush1.xpose.msra.mxu0 0.0
    %586 = vmatprep.subr.mxu0 0.0
    %587 = vmatpush1.xpose.msra.mxu0 0.0
    %588 = vmatprep.subr.mxu0 0.0
    %589 = vmatpush1.xpose.msra.mxu0 0.0
    %590 = vmatprep.subr.mxu0 0.0
    %591 = vmatpush1.xpose.msra.mxu0 0.0
    %592 = vmatprep.subr.mxu0 0.0
    %593 = vmatpush1.xpose.msra.mxu0 0.0
    %594 = vmatprep.subr.mxu0 0.0
    %595 = vmatpush1.xpose.msra.mxu0 0.0
    %596 = vmatprep.subr.mxu0 0.0
    %597 = vmatpush1.xpose.msra.mxu0 0.0
    %598 = vmatprep.subr.mxu0 0.0
    %599 = vmatpush1.xpose.msra.mxu0 0.0
    %600 = vmatprep.subr.mxu0 0.0
    %601 = vmatpush1.xpose.msra.mxu0 0.0
    %602 = vmatprep.subr.mxu0 0.0
    %603 = vmatpush1.xpose.msra.mxu0 0.0
    %604 = vmatprep.subr.mxu0 0.0
    %605 = vmatpush1.xpose.msra.mxu0 0.0
    %606 = vmatprep.subr.mxu0 0.0
    %607 = vmatpush1.xpose.msra.mxu0 0.0
    %608 = vmatprep.subr.mxu0 0.0
    %609 = vmatpush1.xpose.msra.mxu0 0.0
    %610 = vmatprep.subr.mxu0 0.0
    %611 = vmatpush1.xpose.msra.mxu0 0.0
    %612 = vmatprep.subr.mxu0 0.0
    %613 = vmatpush1.xpose.msra.mxu0 0.0
    %614 = vmatprep.subr.mxu0 0.0
    %615 = vmatpush1.xpose.msra.mxu0 0.0
    %616 = vmatprep.subr.mxu0 0.0
    %617 = vmatpush1.xpose.msra.mxu0 0.0
    %618 = vmatprep.subr.mxu0 0.0
    %619 = vmatpush1.xpose.msra.mxu0 0.0
    %620 = vmatprep.subr.mxu0 0.0
    %621 = vmatpush1.xpose.msra.mxu0 0.0
    %622 = vmatprep.subr.mxu0 0.0
    %623 = vmatpush1.xpose.msra.mxu0 0.0
    %624 = vmatprep.subr.mxu0 0.0
    %625 = vmatpush1.xpose.msra.mxu0 0.0
    %626 = vmatprep.mubr.f32.mxu0 0.0
    %627 = vmatmul.mubr.f32.gmra.mrb[0].mxu0 %v557
    %v628 = vpop.f32.mrb[0].mxu0
    %v629 = vadd.f32 0.0, %v628
    %v630 = vpop.f32.mrb[0].mxu0
    %631 = vdwg.mxu0
    %v633 = vsel %vm51, %v555, 0
    %v636 = vsel %vm51, %v521, 0
    %638 = vmatprep.subr.mxu0 0.0
    %639 = vmatpush1.xpose.msra.mxu0 %v636
    %640 = vmatprep.subr.mxu0 0.0
    %641 = vmatpush1.xpose.msra.mxu0 0.0
    %642 = vmatprep.subr.mxu0 0.0
    %643 = vmatpush1.xpose.msra.mxu0 0.0
    %644 = vmatprep.subr.mxu0 0.0
    %645 = vmatpush1.xpose.msra.mxu0 0.0
    %646 = vmatprep.subr.mxu0 0.0
    %647 = vmatpush1.xpose.msra.mxu0 0.0
    %648 = vmatprep.subr.mxu0 0.0
    %649 = vmatpush1.xpose.msra.mxu0 0.0
    %650 = vmatprep.subr.mxu0 0.0
    %651 = vmatpush1.xpose.msra.mxu0 0.0
    %652 = vmatprep.subr.mxu0 0.0
    %653 = vmatpush1.xpose.msra.mxu0 0.0
    %654 = vmatprep.subr.mxu0 0.0
    %655 = vmatpush1.xpose.msra.mxu0 0.0
    %656 = vmatprep.subr.mxu0 0.0
    %657 = vmatpush1.xpose.msra.mxu0 0.0
    %658 = vmatprep.subr.mxu0 0.0
    %659 = vmatpush1.xpose.msra.mxu0 0.0
    %660 = vmatprep.subr.mxu0 0.0
    %661 = vmatpush1.xpose.msra.mxu0 0.0
    %662 = vmatprep.subr.mxu0 0.0
    %663 = vmatpush1.xpose.msra.mxu0 0.0
    %664 = vmatprep.subr.mxu0 0.0
    %665 = vmatpush1.xpose.msra.mxu0 0.0
    %666 = vmatprep.subr.mxu0 0.0
    %667 = vmatpush1.xpose.msra.mxu0 0.0
    %668 = vmatprep.subr.mxu0 0.0
    %669 = vmatpush1.xpose.msra.mxu0 0.0
    %670 = vmatprep.subr.mxu0 0.0
    %671 = vmatpush1.xpose.msra.mxu0 0.0
    %672 = vmatprep.subr.mxu0 0.0
    %673 = vmatpush1.xpose.msra.mxu0 0.0
    %674 = vmatprep.subr.mxu0 0.0
    %675 = vmatpush1.xpose.msra.mxu0 0.0
    %676 = vmatprep.subr.mxu0 0.0
    %677 = vmatpush1.xpose.msra.mxu0 0.0
    %678 = vmatprep.subr.mxu0 0.0
    %679 = vmatpush1.xpose.msra.mxu0 0.0
    %680 = vmatprep.subr.mxu0 0.0
    %681 = vmatpush1.xpose.msra.mxu0 0.0
    %682 = vmatprep.subr.mxu0 0.0
    %683 = vmatpush1.xpose.msra.mxu0 0.0
    %684 = vmatprep.subr.mxu0 0.0
    %685 = vmatpush1.xpose.msra.mxu0 0.0
    %686 = vmatprep.subr.mxu0 0.0
    %687 = vmatpush1.xpose.msra.mxu0 0.0
    %688 = vmatprep.subr.mxu0 0.0
    %689 = vmatpush1.xpose.msra.mxu0 0.0
    %690 = vmatprep.subr.mxu0 0.0
    %691 = vmatpush1.xpose.msra.mxu0 0.0
    %692 = vmatprep.subr.mxu0 0.0
    %693 = vmatpush1.xpose.msra.mxu0 0.0
    %694 = vmatprep.subr.mxu0 0.0
    %695 = vmatpush1.xpose.msra.mxu0 0.0
    %696 = vmatprep.subr.mxu0 0.0
    %697 = vmatpush1.xpose.msra.mxu0 0.0
    %698 = vmatprep.subr.mxu0 0.0
    %699 = vmatpush1.xpose.msra.mxu0 0.0
    %700 = vmatprep.subr.mxu0 0.0
    %701 = vmatpush1.xpose.msra.mxu0 0.0
    %702 = vmatprep.mubr.f32.mxu0 0.0
    %703 = vmatmul.mubr.f32.gmra.mrb[0].mxu0 %v633
    %v704 = vpop.f32.mrb[0].mxu0
    %v705 = vadd.f32 0.0, %v704
    %v706 = vpop.f32.mrb[0].mxu0
    %707 = vdwg.mxu0
    %v708 = vmul.f32 %v528, %v245
    %v709 = vmul.f32 %v529, %v245
    %v712 = vlaneseq
    %v713 = vshrl.u32 %v712, 7
    %v714 = vsub.s32 %v43, %v713
    %v715 = vrot.slane %v708, %v714
    %v716 = vlaneseq
    %v717 = vshrl.u32 %v716, 7
    %v718 = vsub.s32 %v43, %v717
    %v719 = vrot.slane %v709, %v718
    %v720 = vsel %vm71, %v715, %v715
    %v721 = vsel %vm73, %v715, %v720
    %v722 = vsel %vm75, %v715, %v721
    %v723 = vsel %vm77, %v715, %v722
    %v724 = vsel %vm79, %v715, %v723
    %v725 = vsel %vm81, %v715, %v724
    %v726 = vsel %vm71, %v719, %v719
    %v727 = vsel %vm73, %v719, %v726
    %v728 = vsel %vm75, %v719, %v727
    %v729 = vsel %vm77, %v719, %v728
    %v730 = vsel %vm79, %v719, %v729
    %v731 = vsel %vm81, %v719, %v730
    %v734 = vmul.f32 %v629, %v725
    %v735 = vmul.f32 %v705, %v731
    %vm736 = vcmp.ge.f32.partialorder %v734, 0.0
    %vm737 = vcmp.ge.f32.partialorder %v735, 0.0
    %v738 = vmul.f32 %v734, 0.01
    %v739 = vmul.f32 %v735, 0.01
    %v740 = vsel %vm736, %v734, %v738
    %v741 = vsel %vm737, %v735, %v739
    %s742 = sld [smem:[#allocation2 + $0x2]]
    %v743 = vstv %s742
    %v744 = vmul.f32 %v740, %v743
    %v745 = vmul.f32 %v741, %v743
    %v746 = vadd.f32 %v515, %v744
    %v747 = vadd.f32 %v516, %v745
    %v748 = vlaneseq
    %v749 = vshrl.u32 %v748, 7
    %v750 = vsub.s32 0, %v749
    %v751 = vrot.slane %v35, %v750
    %v753 = vsel %vm51, %v746, 0
    %v756 = vsel %vm51, %v747, 0
    %758 = vmatprep.subr.mxu0 0.0
    %759 = vmatpush1.msra.mxu0 %v30
    %760 = vmatprep.subr.mxu0 0.0
    %761 = vmatpush1.msra.mxu0 0.0
    %762 = vmatprep.subr.mxu0 0.0
    %763 = vmatpush1.msra.mxu0 0.0
    %764 = vmatprep.subr.mxu0 0.0
    %765 = vmatpush1.msra.mxu0 0.0
    %766 = vmatprep.subr.mxu0 0.0
    %767 = vmatpush1.msra.mxu0 0.0
    %768 = vmatprep.subr.mxu0 0.0
    %769 = vmatpush1.msra.mxu0 0.0
    %770 = vmatprep.subr.mxu0 0.0
    %771 = vmatpush1.msra.mxu0 0.0
    %772 = vmatprep.subr.mxu0 0.0
    %773 = vmatpush1.msra.mxu0 0.0
    %774 = vmatprep.subr.mxu0 0.0
    %775 = vmatpush1.msra.mxu0 0.0
    %776 = vmatprep.subr.mxu0 0.0
    %777 = vmatpush1.msra.mxu0 0.0
    %778 = vmatprep.subr.mxu0 0.0
    %779 = vmatpush1.msra.mxu0 0.0
    %780 = vmatprep.subr.mxu0 0.0
    %781 = vmatpush1.msra.mxu0 0.0
    %782 = vmatprep.subr.mxu0 0.0
    %783 = vmatpush1.msra.mxu0 0.0
    %784 = vmatprep.subr.mxu0 0.0
    %785 = vmatpush1.msra.mxu0 0.0
    %786 = vmatprep.subr.mxu0 0.0
    %787 = vmatpush1.msra.mxu0 0.0
    %788 = vmatprep.subr.mxu0 0.0
    %789 = vmatpush1.msra.mxu0 0.0
    %790 = vmatprep.subr.mxu0 0.0
    %791 = vmatpush1.msra.mxu0 0.0
    %792 = vmatprep.subr.mxu0 0.0
    %793 = vmatpush1.msra.mxu0 0.0
    %794 = vmatprep.subr.mxu0 0.0
    %795 = vmatpush1.msra.mxu0 0.0
    %796 = vmatprep.subr.mxu0 0.0
    %797 = vmatpush1.msra.mxu0 0.0
    %798 = vmatprep.subr.mxu0 0.0
    %799 = vmatpush1.msra.mxu0 0.0
    %800 = vmatprep.subr.mxu0 0.0
    %801 = vmatpush1.msra.mxu0 0.0
    %802 = vmatprep.subr.mxu0 0.0
    %803 = vmatpush1.msra.mxu0 0.0
    %804 = vmatprep.subr.mxu0 0.0
    %805 = vmatpush1.msra.mxu0 0.0
    %806 = vmatprep.subr.mxu0 0.0
    %807 = vmatpush1.msra.mxu0 0.0
    %808 = vmatprep.subr.mxu0 0.0
    %809 = vmatpush1.msra.mxu0 0.0
    %810 = vmatprep.subr.mxu0 0.0
    %811 = vmatpush1.msra.mxu0 0.0
    %812 = vmatprep.subr.mxu0 0.0
    %813 = vmatpush1.msra.mxu0 0.0
    %814 = vmatprep.subr.mxu0 0.0
    %815 = vmatpush1.msra.mxu0 0.0
    %816 = vmatprep.subr.mxu0 0.0
    %817 = vmatpush1.msra.mxu0 0.0
    %818 = vmatprep.subr.mxu0 0.0
    %819 = vmatpush1.msra.mxu0 0.0
    %820 = vmatprep.subr.mxu0 0.0
    %821 = vmatpush1.msra.mxu0 0.0
    %822 = vmatprep.mubr.f32.mxu0 0.0
    %823 = vmatmul.mubr.f32.gmra.mrb[0].mxu0 %v753
    %v824 = vpop.f32.mrb[0].mxu0
    %v825 = vadd.f32 %v751, %v824
    %v826 = vpop.f32.mrb[0].mxu0
    %827 = vmatprep.mubr.f32.mxu0 0.0
    %828 = vmatmul.mubr.f32.gmra.mrb[0].mxu0 %v756
    %v829 = vpop.f32.mrb[0].mxu0
    %v830 = vadd.f32 %v751, %v829
    %v831 = vpop.f32.mrb[0].mxu0
    %832 = vdwg.mxu0
    %v835 = vrot.slane %v830, 7
    %v836 = vsel %vm70, %v835, %v825
    %v838 = vrot.slane %v825, 7
    %v839 = vrot.slane %v830, 6
    %v840 = vsel %vm70, %v839, %v838
    %vm842 = vcmask 130048
    %v843 = vsel %vm842, %v836, %v840
    %vm844 = vcmask 261120
    %v845 = vsel %vm844, %v843, %v836
    %vm846 = vcmask 392192
    %v847 = vsel %vm846, %v845, %v840
    %vm848 = vcmask 523264
    %v849 = vsel %vm848, %v847, %v836
    %vm850 = vcmask 654336
    %v851 = vsel %vm850, %v849, %v840
    %v852 = vlaneseq
    %v853 = vshrl.u32 %v852, 7
    %v854 = vsub.s32 0, %v853
    %v855 = vrot.slane %v36, %v854
    %v857 = vsel %vm844, 0.0, 0
    %859 = vmatprep.subr.mxu0 0.0
    %860 = vmatpush1.msra.mxu0 %v31
    %861 = vmatprep.subr.mxu0 0.0
    %862 = vmatpush1.msra.mxu0 %v32
    %863 = vmatprep.subr.mxu0 0.0
    %864 = vmatpush1.msra.mxu0 %v33
    %865 = vmatprep.subr.mxu0 0.0
    %866 = vmatpush1.msra.mxu0 %v34
    %867 = vmatprep.subr.mxu0 0.0
    %868 = vmatpush1.msra.mxu0 0.0
    %869 = vmatprep.subr.mxu0 0.0
    %870 = vmatpush1.msra.mxu0 0.0
    %871 = vmatprep.subr.mxu0 0.0
    %872 = vmatpush1.msra.mxu0 0.0
    %873 = vmatprep.subr.mxu0 0.0
    %874 = vmatpush1.msra.mxu0 0.0
    %875 = vmatprep.subr.mxu0 0.0
    %876 = vmatpush1.msra.mxu0 0.0
    %877 = vmatprep.subr.mxu0 0.0
    %878 = vmatpush1.msra.mxu0 0.0
    %879 = vmatprep.subr.mxu0 0.0
    %880 = vmatpush1.msra.mxu0 0.0
    %881 = vmatprep.subr.mxu0 0.0
    %882 = vmatpush1.msra.mxu0 0.0
    %883 = vmatprep.subr.mxu0 0.0
    %884 = vmatpush1.msra.mxu0 0.0
    %885 = vmatprep.subr.mxu0 0.0
    %886 = vmatpush1.msra.mxu0 0.0
    %887 = vmatprep.subr.mxu0 0.0
    %888 = vmatpush1.msra.mxu0 0.0
    %889 = vmatprep.subr.mxu0 0.0
    %890 = vmatpush1.msra.mxu0 0.0
    %891 = vmatprep.subr.mxu0 0.0
    %892 = vmatpush1.msra.mxu0 0.0
    %893 = vmatprep.subr.mxu0 0.0
    %894 = vmatpush1.msra.mxu0 0.0
    %895 = vmatprep.subr.mxu0 0.0
    %896 = vmatpush1.msra.mxu0 0.0
    %897 = vmatprep.subr.mxu0 0.0
    %898 = vmatpush1.msra.mxu0 0.0
    %899 = vmatprep.subr.mxu0 0.0
    %900 = vmatpush1.msra.mxu0 0.0
    %901 = vmatprep.subr.mxu0 0.0
    %902 = vmatpush1.msra.mxu0 0.0
    %903 = vmatprep.subr.mxu0 0.0
    %904 = vmatpush1.msra.mxu0 0.0
    %905 = vmatprep.subr.mxu0 0.0
    %906 = vmatpush1.msra.mxu0 0.0
    %907 = vmatprep.subr.mxu0 0.0
    %908 = vmatpush1.msra.mxu0 0.0
    %909 = vmatprep.subr.mxu0 0.0
    %910 = vmatpush1.msra.mxu0 0.0
    %911 = vmatprep.subr.mxu0 0.0
    %912 = vmatpush1.msra.mxu0 0.0
    %913 = vmatprep.subr.mxu0 0.0
    %914 = vmatpush1.msra.mxu0 0.0
    %915 = vmatprep.subr.mxu0 0.0
    %916 = vmatpush1.msra.mxu0 0.0
    %917 = vmatprep.subr.mxu0 0.0
    %918 = vmatpush1.msra.mxu0 0.0
    %919 = vmatprep.subr.mxu0 0.0
    %920 = vmatpush1.msra.mxu0 0.0
    %921 = vmatprep.subr.mxu0 0.0
    %922 = vmatpush1.msra.mxu0 0.0
    %923 = vmatprep.mubr.f32.mxu0 0.0
    %924 = vmatmul.mubr.f32.gmra.mrb[0].mxu0 %v857
    %v925 = vpop.f32.mrb[0].mxu0
    %v926 = vadd.f32 %v855, %v925
    %v927 = vpop.f32.mrb[0].mxu0
    %928 = vdwg.mxu0
    %v929 = vadd.f32 %v851, %v926
    %v930 = vxor.u32 %v929, 2147483648
    %v931 = vmul.f32 %v930, 1.442695
    %v932 = vpow.pop %v931
    %v933 = vadd.f32 %v932, 1.0
    %v934 = vrcp.pop %v933
    %v935 = vmul.f32 1.0, %v934
    %937 = vrot.lane.b32.xlu0 %v926, 64
    %v938 = vpop.permute.xlu0 %937
    %v940 = vmul.f32 %v935, %v938
    %942 = vrot.lane.b32.xlu0 %v940, 64
    %v943 = vpop.permute.xlu0 %942
    %v945 = vadd.f32 %v851, %v943
    %v946 = vtanh.pop %v945
    %v947 = vsub.f32 1.0, %v935
    %949 = vrot.lane.b32.xlu0 %v946, 96
    %v950 = vpop.permute.xlu0 %949
    %v952 = vmul.f32 %v947, %v950
    %v953 = vmul.f32 %v935, 0.0
    %v954 = vadd.f32 %v952, %v953
    %v955 = vsel %vm71, %v835, %v825
    %v957 = vrot.slane %v825, 5
    %v958 = vrot.slane %v830, 4
    %v959 = vsel %vm71, %v958, %v957
    %v961 = vsel %vm842, %v955, %v959
    %v962 = vsel %vm844, %v961, %v955
    %v963 = vsel %vm846, %v962, %v959
    %v964 = vsel %vm848, %v963, %v955
    %v965 = vsel %vm850, %v964, %v959
    %967 = vrot.lane.b32.xlu0 %v954, 96
    %v968 = vpop.permute.xlu0 %967
    %v969 = vsel %vm844, %v968, 0
    %971 = vmatprep.subr.mxu0 0.0
    %972 = vmatpush1.msra.mxu0 %v31
    %973 = vmatprep.subr.mxu0 0.0
    %974 = vmatpush1.msra.mxu0 %v32
    %975 = vmatprep.subr.mxu0 0.0
    %976 = vmatpush1.msra.mxu0 %v33
    %977 = vmatprep.subr.mxu0 0.0
    %978 = vmatpush1.msra.mxu0 %v34
    %979 = vmatprep.subr.mxu0 0.0
    %980 = vmatpush1.msra.mxu0 0.0
    %981 = vmatprep.subr.mxu0 0.0
    %982 = vmatpush1.msra.mxu0 0.0
    %983 = vmatprep.subr.mxu0 0.0
    %984 = vmatpush1.msra.mxu0 0.0
    %985 = vmatprep.subr.mxu0 0.0
    %986 = vmatpush1.msra.mxu0 0.0
    %987 = vmatprep.subr.mxu0 0.0
    %988 = vmatpush1.msra.mxu0 0.0
    %989 = vmatprep.subr.mxu0 0.0
    %990 = vmatpush1.msra.mxu0 0.0
    %991 = vmatprep.subr.mxu0 0.0
    %992 = vmatpush1.msra.mxu0 0.0
    %993 = vmatprep.subr.mxu0 0.0
    %994 = vmatpush1.msra.mxu0 0.0
    %995 = vmatprep.subr.mxu0 0.0
    %996 = vmatpush1.msra.mxu0 0.0
    %997 = vmatprep.subr.mxu0 0.0
    %998 = vmatpush1.msra.mxu0 0.0
    %999 = vmatprep.subr.mxu0 0.0
    %1000 = vmatpush1.msra.mxu0 0.0
    %1001 = vmatprep.subr.mxu0 0.0
    %1002 = vmatpush1.msra.mxu0 0.0
    %1003 = vmatprep.subr.mxu0 0.0
    %1004 = vmatpush1.msra.mxu0 0.0
    %1005 = vmatprep.subr.mxu0 0.0
    %1006 = vmatpush1.msra.mxu0 0.0
    %1007 = vmatprep.subr.mxu0 0.0
    %1008 = vmatpush1.msra.mxu0 0.0
    %1009 = vmatprep.subr.mxu0 0.0
    %1010 = vmatpush1.msra.mxu0 0.0
    %1011 = vmatprep.subr.mxu0 0.0
    %1012 = vmatpush1.msra.mxu0 0.0
    %1013 = vmatprep.subr.mxu0 0.0
    %1014 = vmatpush1.msra.mxu0 0.0
    %1015 = vmatprep.subr.mxu0 0.0
    %1016 = vmatpush1.msra.mxu0 0.0
    %1017 = vmatprep.subr.mxu0 0.0
    %1018 = vmatpush1.msra.mxu0 0.0
    %1019 = vmatprep.subr.mxu0 0.0
    %1020 = vmatpush1.msra.mxu0 0.0
    %1021 = vmatprep.subr.mxu0 0.0
    %1022 = vmatpush1.msra.mxu0 0.0
    %1023 = vmatprep.subr.mxu0 0.0
    %1024 = vmatpush1.msra.mxu0 0.0
    %1025 = vmatprep.subr.mxu0 0.0
    %1026 = vmatpush1.msra.mxu0 0.0
    %1027 = vmatprep.subr.mxu0 0.0
    %1028 = vmatpush1.msra.mxu0 0.0
    %1029 = vmatprep.subr.mxu0 0.0
    %1030 = vmatpush1.msra.mxu0 0.0
    %1031 = vmatprep.subr.mxu0 0.0
    %1032 = vmatpush1.msra.mxu0 0.0
    %1033 = vmatprep.subr.mxu0 0.0
    %1034 = vmatpush1.msra.mxu0 0.0
    %1035 = vmatprep.mubr.f32.mxu0 0.0
    %1036 = vmatmul.mubr.f32.gmra.mrb[0].mxu0 %v969
    %v1037 = vpop.f32.mrb[0].mxu0
    %v1038 = vadd.f32 %v855, %v1037
    %v1039 = vpop.f32.mrb[0].mxu0
    %1040 = vdwg.mxu0
    %v1042 = vrot.slane %v1038, 7
    %v1044 = vadd.f32 %v965, %v1042
    %v1045 = vxor.u32 %v1044, 2147483648
    %v1046 = vmul.f32 %v1045, 1.442695
    %v1047 = vpow.pop %v1046
    %v1048 = vadd.f32 %v1047, 1.0
    %v1049 = vrcp.pop %v1048
    %v1050 = vmul.f32 1.0, %v1049
    %1051 = vrot.lane.b32.xlu0 %v1042, 64
    %v1052 = vpop.permute.xlu0 %1051
    %v1054 = vmul.f32 %v1050, %v1052
    %1056 = vrot.lane.b32.xlu0 %v1054, 64
    %v1057 = vpop.permute.xlu0 %1056
    %v1059 = vadd.f32 %v965, %v1057
    %v1060 = vtanh.pop %v1059
    %v1061 = vsub.f32 1.0, %v1050
    %1063 = vrot.lane.b32.xlu0 %v1060, 96
    %v1064 = vpop.permute.xlu0 %1063
    %v1066 = vmul.f32 %v1061, %v1064
    %v1067 = vrot.slane %v954, 7
    %v1069 = vmul.f32 %v1050, %v1067
    %v1070 = vadd.f32 %v1066, %v1069
    %v1071 = vsel %vm73, %v835, %v825
    %v1073 = vrot.slane %v825, 3
    %v1074 = vrot.slane %v830, 2
    %v1075 = vsel %vm73, %v1074, %v1073
    %v1077 = vsel %vm842, %v1071, %v1075
    %v1078 = vsel %vm844, %v1077, %v1071
    %v1079 = vsel %vm846, %v1078, %v1075
    %v1080 = vsel %vm848, %v1079, %v1071
    %v1081 = vsel %vm850, %v1080, %v1075
    %v1083 = vrot.slane %v1070, 1
    %1084 = vrot.lane.b32.xlu0 %v1083, 96
    %v1085 = vpop.permute.xlu0 %1084
    %v1086 = vsel %vm844, %v1085, 0
    %1088 = vmatprep.subr.mxu0 0.0
    %1089 = vmatpush1.msra.mxu0 %v31
    %1090 = vmatprep.subr.mxu0 0.0
    %1091 = vmatpush1.msra.mxu0 %v32
    %1092 = vmatprep.subr.mxu0 0.0
    %1093 = vmatpush1.msra.mxu0 %v33
    %1094 = vmatprep.subr.mxu0 0.0
    %1095 = vmatpush1.msra.mxu0 %v34
    %1096 = vmatprep.subr.mxu0 0.0
    %1097 = vmatpush1.msra.mxu0 0.0
    %1098 = vmatprep.subr.mxu0 0.0
    %1099 = vmatpush1.msra.mxu0 0.0
    %1100 = vmatprep.subr.mxu0 0.0
    %1101 = vmatpush1.msra.mxu0 0.0
    %1102 = vmatprep.subr.mxu0 0.0
    %1103 = vmatpush1.msra.mxu0 0.0
    %1104 = vmatprep.subr.mxu0 0.0
    %1105 = vmatpush1.msra.mxu0 0.0
    %1106 = vmatprep.subr.mxu0 0.0
    %1107 = vmatpush1.msra.mxu0 0.0
    %1108 = vmatprep.subr.mxu0 0.0
    %1109 = vmatpush1.msra.mxu0 0.0
    %1110 = vmatprep.subr.mxu0 0.0
    %1111 = vmatpush1.msra.mxu0 0.0
    %1112 = vmatprep.subr.mxu0 0.0
    %1113 = vmatpush1.msra.mxu0 0.0
    %1114 = vmatprep.subr.mxu0 0.0
    %1115 = vmatpush1.msra.mxu0 0.0
    %1116 = vmatprep.subr.mxu0 0.0
    %1117 = vmatpush1.msra.mxu0 0.0
    %1118 = vmatprep.subr.mxu0 0.0
    %1119 = vmatpush1.msra.mxu0 0.0
    %1120 = vmatprep.subr.mxu0 0.0
    %1121 = vmatpush1.msra.mxu0 0.0
    %1122 = vmatprep.subr.mxu0 0.0
    %1123 = vmatpush1.msra.mxu0 0.0
    %1124 = vmatprep.subr.mxu0 0.0
    %1125 = vmatpush1.msra.mxu0 0.0
    %1126 = vmatprep.subr.mxu0 0.0
    %1127 = vmatpush1.msra.mxu0 0.0
    %1128 = vmatprep.subr.mxu0 0.0
    %1129 = vmatpush1.msra.mxu0 0.0
    %1130 = vmatprep.subr.mxu0 0.0
    %1131 = vmatpush1.msra.mxu0 0.0
    %1132 = vmatprep.subr.mxu0 0.0
    %1133 = vmatpush1.msra.mxu0 0.0
    %1134 = vmatprep.subr.mxu0 0.0
    %1135 = vmatpush1.msra.mxu0 0.0
    %1136 = vmatprep.subr.mxu0 0.0
    %1137 = vmatpush1.msra.mxu0 0.0
    %1138 = vmatprep.subr.mxu0 0.0
    %1139 = vmatpush1.msra.mxu0 0.0
    %1140 = vmatprep.subr.mxu0 0.0
    %1141 = vmatpush1.msra.mxu0 0.0
    %1142 = vmatprep.subr.mxu0 0.0
    %1143 = vmatpush1.msra.mxu0 0.0
    %1144 = vmatprep.subr.mxu0 0.0
    %1145 = vmatpush1.msra.mxu0 0.0
    %1146 = vmatprep.subr.mxu0 0.0
    %1147 = vmatpush1.msra.mxu0 0.0
    %1148 = vmatprep.subr.mxu0 0.0
    %1149 = vmatpush1.msra.mxu0 0.0
    %1150 = vmatprep.subr.mxu0 0.0
    %1151 = vmatpush1.msra.mxu0 0.0
    %1152 = vmatprep.mubr.f32.mxu0 0.0
    %1153 = vmatmul.mubr.f32.gmra.mrb[0].mxu0 %v1086
    %v1154 = vpop.f32.mrb[0].mxu0
    %v1155 = vadd.f32 %v855, %v1154
    %v1156 = vpop.f32.mrb[0].mxu0
    %1157 = vdwg.mxu0
    %v1159 = vrot.slane %v1155, 6
    %v1161 = vadd.f32 %v1081, %v1159
    %v1162 = vxor.u32 %v1161, 2147483648
    %v1163 = vmul.f32 %v1162, 1.442695
    %v1164 = vpow.pop %v1163
    %v1165 = vadd.f32 %v1164, 1.0
    %v1166 = vrcp.pop %v1165
    %v1167 = vmul.f32 1.0, %v1166
    %1168 = vrot.lane.b32.xlu0 %v1159, 64
    %v1169 = vpop.permute.xlu0 %1168
    %v1171 = vmul.f32 %v1167, %v1169
    %1173 = vrot.lane.b32.xlu0 %v1171, 64
    %v1174 = vpop.permute.xlu0 %1173
    %v1176 = vadd.f32 %v1081, %v1174
    %v1177 = vtanh.pop %v1176
    %v1178 = vsub.f32 1.0, %v1167
    %1180 = vrot.lane.b32.xlu0 %v1177, 96
    %v1181 = vpop.permute.xlu0 %1180
    %v1183 = vmul.f32 %v1178, %v1181
    %v1184 = vrot.slane %v1070, 7
    %v1186 = vmul.f32 %v1167, %v1184
    %v1187 = vadd.f32 %v1183, %v1186
    %v1188 = vsel %vm75, %v835, %v825
    %v1190 = vrot.slane %v825, 1
    %v1191 = vsel %vm75, %v830, %v1190
    %v1193 = vsel %vm842, %v1188, %v1191
    %v1194 = vsel %vm844, %v1193, %v1188
    %v1195 = vsel %vm846, %v1194, %v1191
    %v1196 = vsel %vm848, %v1195, %v1188
    %v1197 = vsel %vm850, %v1196, %v1191
    %v1199 = vrot.slane %v1187, 2
    %1200 = vrot.lane.b32.xlu0 %v1199, 96
    %v1201 = vpop.permute.xlu0 %1200
    %v1202 = vsel %vm844, %v1201, 0
    %1204 = vmatprep.subr.mxu0 0.0
    %1205 = vmatpush1.msra.mxu0 %v31
    %1206 = vmatprep.subr.mxu0 0.0
    %1207 = vmatpush1.msra.mxu0 %v32
    %1208 = vmatprep.subr.mxu0 0.0
    %1209 = vmatpush1.msra.mxu0 %v33
    %1210 = vmatprep.subr.mxu0 0.0
    %1211 = vmatpush1.msra.mxu0 %v34
    %1212 = vmatprep.subr.mxu0 0.0
    %1213 = vmatpush1.msra.mxu0 0.0
    %1214 = vmatprep.subr.mxu0 0.0
    %1215 = vmatpush1.msra.mxu0 0.0
    %1216 = vmatprep.subr.mxu0 0.0
    %1217 = vmatpush1.msra.mxu0 0.0
    %1218 = vmatprep.subr.mxu0 0.0
    %1219 = vmatpush1.msra.mxu0 0.0
    %1220 = vmatprep.subr.mxu0 0.0
    %1221 = vmatpush1.msra.mxu0 0.0
    %1222 = vmatprep.subr.mxu0 0.0
    %1223 = vmatpush1.msra.mxu0 0.0
    %1224 = vmatprep.subr.mxu0 0.0
    %1225 = vmatpush1.msra.mxu0 0.0
    %1226 = vmatprep.subr.mxu0 0.0
    %1227 = vmatpush1.msra.mxu0 0.0
    %1228 = vmatprep.subr.mxu0 0.0
    %1229 = vmatpush1.msra.mxu0 0.0
    %1230 = vmatprep.subr.mxu0 0.0
    %1231 = vmatpush1.msra.mxu0 0.0
    %1232 = vmatprep.subr.mxu0 0.0
    %1233 = vmatpush1.msra.mxu0 0.0
    %1234 = vmatprep.subr.mxu0 0.0
    %1235 = vmatpush1.msra.mxu0 0.0
    %1236 = vmatprep.subr.mxu0 0.0
    %1237 = vmatpush1.msra.mxu0 0.0
    %1238 = vmatprep.subr.mxu0 0.0
    %1239 = vmatpush1.msra.mxu0 0.0
    %1240 = vmatprep.subr.mxu0 0.0
    %1241 = vmatpush1.msra.mxu0 0.0
    %1242 = vmatprep.subr.mxu0 0.0
    %1243 = vmatpush1.msra.mxu0 0.0
    %1244 = vmatprep.subr.mxu0 0.0
    %1245 = vmatpush1.msra.mxu0 0.0
    %1246 = vmatprep.subr.mxu0 0.0
    %1247 = vmatpush1.msra.mxu0 0.0
    %1248 = vmatprep.subr.mxu0 0.0
    %1249 = vmatpush1.msra.mxu0 0.0
    %1250 = vmatprep.subr.mxu0 0.0
    %1251 = vmatpush1.msra.mxu0 0.0
    %1252 = vmatprep.subr.mxu0 0.0
    %1253 = vmatpush1.msra.mxu0 0.0
    %1254 = vmatprep.subr.mxu0 0.0
    %1255 = vmatpush1.msra.mxu0 0.0
    %1256 = vmatprep.subr.mxu0 0.0
    %1257 = vmatpush1.msra.mxu0 0.0
    %1258 = vmatprep.subr.mxu0 0.0
    %1259 = vmatpush1.msra.mxu0 0.0
    %1260 = vmatprep.subr.mxu0 0.0
    %1261 = vmatpush1.msra.mxu0 0.0
    %1262 = vmatprep.subr.mxu0 0.0
    %1263 = vmatpush1.msra.mxu0 0.0
    %1264 = vmatprep.subr.mxu0 0.0
    %1265 = vmatpush1.msra.mxu0 0.0
    %1266 = vmatprep.subr.mxu0 0.0
    %1267 = vmatpush1.msra.mxu0 0.0
    %1268 = vmatprep.mubr.f32.mxu0 0.0
    %1269 = vmatmul.mubr.f32.gmra.mrb[0].mxu0 %v1202
    %v1270 = vpop.f32.mrb[0].mxu0
    %v1271 = vadd.f32 %v855, %v1270
    %v1272 = vpop.f32.mrb[0].mxu0
    %1273 = vdwg.mxu0
    %v1275 = vrot.slane %v1271, 5
    %v1277 = vadd.f32 %v1197, %v1275
    %v1278 = vxor.u32 %v1277, 2147483648
    %v1279 = vmul.f32 %v1278, 1.442695
    %v1280 = vpow.pop %v1279
    %v1281 = vadd.f32 %v1280, 1.0
    %v1282 = vrcp.pop %v1281
    %v1283 = vmul.f32 1.0, %v1282
    %1284 = vrot.lane.b32.xlu0 %v1275, 64
    %v1285 = vpop.permute.xlu0 %1284
    %v1287 = vmul.f32 %v1283, %v1285
    %1289 = vrot.lane.b32.xlu0 %v1287, 64
    %v1290 = vpop.permute.xlu0 %1289
    %v1292 = vadd.f32 %v1197, %v1290
    %v1293 = vtanh.pop %v1292
    %v1294 = vsub.f32 1.0, %v1283
    %1296 = vrot.lane.b32.xlu0 %v1293, 96
    %v1297 = vpop.permute.xlu0 %1296
    %v1299 = vmul.f32 %v1294, %v1297
    %v1300 = vrot.slane %v1187, 7
    %v1302 = vmul.f32 %v1283, %v1300
    %v1303 = vadd.f32 %v1299, %v1302
    %v1304 = vsel %vm77, %v835, %v825
    %v1306 = vsel %vm77, %v839, %v838
    %v1308 = vsel %vm842, %v1304, %v1306
    %v1309 = vsel %vm844, %v1308, %v1304
    %v1310 = vsel %vm846, %v1309, %v1306
    %v1311 = vsel %vm848, %v1310, %v1304
    %v1312 = vsel %vm850, %v1311, %v1306
    %v1314 = vrot.slane %v1303, 3
    %1315 = vrot.lane.b32.xlu0 %v1314, 96
    %v1316 = vpop.permute.xlu0 %1315
    %v1317 = vsel %vm844, %v1316, 0
    %1319 = vmatprep.subr.mxu0 0.0
    %1320 = vmatpush1.msra.mxu0 %v31
    %1321 = vmatprep.subr.mxu0 0.0
    %1322 = vmatpush1.msra.mxu0 %v32
    %1323 = vmatprep.subr.mxu0 0.0
    %1324 = vmatpush1.msra.mxu0 %v33
    %1325 = vmatprep.subr.mxu0 0.0
    %1326 = vmatpush1.msra.mxu0 %v34
    %1327 = vmatprep.subr.mxu0 0.0
    %1328 = vmatpush1.msra.mxu0 0.0
    %1329 = vmatprep.subr.mxu0 0.0
    %1330 = vmatpush1.msra.mxu0 0.0
    %1331 = vmatprep.subr.mxu0 0.0
    %1332 = vmatpush1.msra.mxu0 0.0
    %1333 = vmatprep.subr.mxu0 0.0
    %1334 = vmatpush1.msra.mxu0 0.0
    %1335 = vmatprep.subr.mxu0 0.0
    %1336 = vmatpush1.msra.mxu0 0.0
    %1337 = vmatprep.subr.mxu0 0.0
    %1338 = vmatpush1.msra.mxu0 0.0
    %1339 = vmatprep.subr.mxu0 0.0
    %1340 = vmatpush1.msra.mxu0 0.0
    %1341 = vmatprep.subr.mxu0 0.0
    %1342 = vmatpush1.msra.mxu0 0.0
    %1343 = vmatprep.subr.mxu0 0.0
    %1344 = vmatpush1.msra.mxu0 0.0
    %1345 = vmatprep.subr.mxu0 0.0
    %1346 = vmatpush1.msra.mxu0 0.0
    %1347 = vmatprep.subr.mxu0 0.0
    %1348 = vmatpush1.msra.mxu0 0.0
    %1349 = vmatprep.subr.mxu0 0.0
    %1350 = vmatpush1.msra.mxu0 0.0
    %1351 = vmatprep.subr.mxu0 0.0
    %1352 = vmatpush1.msra.mxu0 0.0
    %1353 = vmatprep.subr.mxu0 0.0
    %1354 = vmatpush1.msra.mxu0 0.0
    %1355 = vmatprep.subr.mxu0 0.0
    %1356 = vmatpush1.msra.mxu0 0.0
    %1357 = vmatprep.subr.mxu0 0.0
    %1358 = vmatpush1.msra.mxu0 0.0
    %1359 = vmatprep.subr.mxu0 0.0
    %1360 = vmatpush1.msra.mxu0 0.0
    %1361 = vmatprep.subr.mxu0 0.0
    %1362 = vmatpush1.msra.mxu0 0.0
    %1363 = vmatprep.subr.mxu0 0.0
    %1364 = vmatpush1.msra.mxu0 0.0
    %1365 = vmatprep.subr.mxu0 0.0
    %1366 = vmatpush1.msra.mxu0 0.0
    %1367 = vmatprep.subr.mxu0 0.0
    %1368 = vmatpush1.msra.mxu0 0.0
    %1369 = vmatprep.subr.mxu0 0.0
    %1370 = vmatpush1.msra.mxu0 0.0
    %1371 = vmatprep.subr.mxu0 0.0
    %1372 = vmatpush1.msra.mxu0 0.0
    %1373 = vmatprep.subr.mxu0 0.0
    %1374 = vmatpush1.msra.mxu0 0.0
    %1375 = vmatprep.subr.mxu0 0.0
    %1376 = vmatpush1.msra.mxu0 0.0
    %1377 = vmatprep.subr.mxu0 0.0
    %1378 = vmatpush1.msra.mxu0 0.0
    %1379 = vmatprep.subr.mxu0 0.0
    %1380 = vmatpush1.msra.mxu0 0.0
    %1381 = vmatprep.subr.mxu0 0.0
    %1382 = vmatpush1.msra.mxu0 0.0
    %1383 = vmatprep.mubr.f32.mxu0 0.0
    %1384 = vmatmul.mubr.f32.gmra.mrb[0].mxu0 %v1317
    %v1385 = vpop.f32.mrb[0].mxu0
    %v1386 = vadd.f32 %v855, %v1385
    %v1387 = vpop.f32.mrb[0].mxu0
    %1388 = vdwg.mxu0
    %v1390 = vrot.slane %v1386, 4
    %v1392 = vadd.f32 %v1312, %v1390
    %v1393 = vxor.u32 %v1392, 2147483648
    %v1394 = vmul.f32 %v1393, 1.442695
    %v1395 = vpow.pop %v1394
    %v1396 = vadd.f32 %v1395, 1.0
    %v1397 = vrcp.pop %v1396
    %v1398 = vmul.f32 1.0, %v1397
    %1399 = vrot.lane.b32.xlu0 %v1390, 64
    %v1400 = vpop.permute.xlu0 %1399
    %v1402 = vmul.f32 %v1398, %v1400
    %1404 = vrot.lane.b32.xlu0 %v1402, 64
    %v1405 = vpop.permute.xlu0 %1404
    %v1407 = vadd.f32 %v1312, %v1405
    %v1408 = vtanh.pop %v1407
    %v1409 = vsub.f32 1.0, %v1398
    %1411 = vrot.lane.b32.xlu0 %v1408, 96
    %v1412 = vpop.permute.xlu0 %1411
    %v1414 = vmul.f32 %v1409, %v1412
    %v1415 = vrot.slane %v1303, 7
    %v1417 = vmul.f32 %v1398, %v1415
    %v1418 = vadd.f32 %v1414, %v1417
    %v1419 = vsel %vm79, %v835, %v825
    %v1421 = vsel %vm79, %v958, %v957
    %v1423 = vsel %vm842, %v1419, %v1421
    %v1424 = vsel %vm844, %v1423, %v1419
    %v1425 = vsel %vm846, %v1424, %v1421
    %v1426 = vsel %vm848, %v1425, %v1419
    %v1427 = vsel %vm850, %v1426, %v1421
    %v1429 = vrot.slane %v1418, 4
    %1430 = vrot.lane.b32.xlu0 %v1429, 96
    %v1431 = vpop.permute.xlu0 %1430
    %v1432 = vsel %vm844, %v1431, 0
    %1434 = vmatprep.subr.mxu0 0.0
    %1435 = vmatpush1.msra.mxu0 %v31
    %1436 = vmatprep.subr.mxu0 0.0
    %1437 = vmatpush1.msra.mxu0 %v32
    %1438 = vmatprep.subr.mxu0 0.0
    %1439 = vmatpush1.msra.mxu0 %v33
    %1440 = vmatprep.subr.mxu0 0.0
    %1441 = vmatpush1.msra.mxu0 %v34
    %1442 = vmatprep.subr.mxu0 0.0
    %1443 = vmatpush1.msra.mxu0 0.0
    %1444 = vmatprep.subr.mxu0 0.0
    %1445 = vmatpush1.msra.mxu0 0.0
    %1446 = vmatprep.subr.mxu0 0.0
    %1447 = vmatpush1.msra.mxu0 0.0
    %1448 = vmatprep.subr.mxu0 0.0
    %1449 = vmatpush1.msra.mxu0 0.0
    %1450 = vmatprep.subr.mxu0 0.0
    %1451 = vmatpush1.msra.mxu0 0.0
    %1452 = vmatprep.subr.mxu0 0.0
    %1453 = vmatpush1.msra.mxu0 0.0
    %1454 = vmatprep.subr.mxu0 0.0
    %1455 = vmatpush1.msra.mxu0 0.0
    %1456 = vmatprep.subr.mxu0 0.0
    %1457 = vmatpush1.msra.mxu0 0.0
    %1458 = vmatprep.subr.mxu0 0.0
    %1459 = vmatpush1.msra.mxu0 0.0
    %1460 = vmatprep.subr.mxu0 0.0
    %1461 = vmatpush1.msra.mxu0 0.0
    %1462 = vmatprep.subr.mxu0 0.0
    %1463 = vmatpush1.msra.mxu0 0.0
    %1464 = vmatprep.subr.mxu0 0.0
    %1465 = vmatpush1.msra.mxu0 0.0
    %1466 = vmatprep.subr.mxu0 0.0
    %1467 = vmatpush1.msra.mxu0 0.0
    %1468 = vmatprep.subr.mxu0 0.0
    %1469 = vmatpush1.msra.mxu0 0.0
    %1470 = vmatprep.subr.mxu0 0.0
    %1471 = vmatpush1.msra.mxu0 0.0
    %1472 = vmatprep.subr.mxu0 0.0
    %1473 = vmatpush1.msra.mxu0 0.0
    %1474 = vmatprep.subr.mxu0 0.0
    %1475 = vmatpush1.msra.mxu0 0.0
    %1476 = vmatprep.subr.mxu0 0.0
    %1477 = vmatpush1.msra.mxu0 0.0
    %1478 = vmatprep.subr.mxu0 0.0
    %1479 = vmatpush1.msra.mxu0 0.0
    %1480 = vmatprep.subr.mxu0 0.0
    %1481 = vmatpush1.msra.mxu0 0.0
    %1482 = vmatprep.subr.mxu0 0.0
    %1483 = vmatpush1.msra.mxu0 0.0
    %1484 = vmatprep.subr.mxu0 0.0
    %1485 = vmatpush1.msra.mxu0 0.0
    %1486 = vmatprep.subr.mxu0 0.0
    %1487 = vmatpush1.msra.mxu0 0.0
    %1488 = vmatprep.subr.mxu0 0.0
    %1489 = vmatpush1.msra.mxu0 0.0
    %1490 = vmatprep.subr.mxu0 0.0
    %1491 = vmatpush1.msra.mxu0 0.0
    %1492 = vmatprep.subr.mxu0 0.0
    %1493 = vmatpush1.msra.mxu0 0.0
    %1494 = vmatprep.subr.mxu0 0.0
    %1495 = vmatpush1.msra.mxu0 0.0
    %1496 = vmatprep.subr.mxu0 0.0
    %1497 = vmatpush1.msra.mxu0 0.0
    %1498 = vmatprep.mubr.f32.mxu0 0.0
    %1499 = vmatmul.mubr.f32.gmra.mrb[0].mxu0 %v1432
    %v1500 = vpop.f32.mrb[0].mxu0
    %v1501 = vadd.f32 %v855, %v1500
    %v1502 = vpop.f32.mrb[0].mxu0
    %1503 = vdwg.mxu0
    %v1505 = vrot.slane %v1501, 3
    %v1507 = vadd.f32 %v1427, %v1505
    %v1508 = vxor.u32 %v1507, 2147483648
    %v1509 = vmul.f32 %v1508, 1.442695
    %v1510 = vpow.pop %v1509
    %v1511 = vadd.f32 %v1510, 1.0
    %v1512 = vrcp.pop %v1511
    %v1513 = vmul.f32 1.0, %v1512
    %1514 = vrot.lane.b32.xlu0 %v1505, 64
    %v1515 = vpop.permute.xlu0 %1514
    %v1517 = vmul.f32 %v1513, %v1515
    %1519 = vrot.lane.b32.xlu0 %v1517, 64
    %v1520 = vpop.permute.xlu0 %1519
    %v1522 = vadd.f32 %v1427, %v1520
    %v1523 = vtanh.pop %v1522
    %v1524 = vsub.f32 1.0, %v1513
    %1526 = vrot.lane.b32.xlu0 %v1523, 96
    %v1527 = vpop.permute.xlu0 %1526
    %v1529 = vmul.f32 %v1524, %v1527
    %v1530 = vrot.slane %v1418, 7
    %v1532 = vmul.f32 %v1513, %v1530
    %v1533 = vadd.f32 %v1529, %v1532
    %v1534 = vsel %vm81, %v835, %v825
    %v1536 = vsel %vm81, %v1074, %v1073
    %v1538 = vsel %vm842, %v1534, %v1536
    %v1539 = vsel %vm844, %v1538, %v1534
    %v1540 = vsel %vm846, %v1539, %v1536
    %v1541 = vsel %vm848, %v1540, %v1534
    %v1542 = vsel %vm850, %v1541, %v1536
    %v1544 = vrot.slane %v1533, 5
    %1545 = vrot.lane.b32.xlu0 %v1544, 96
    %v1546 = vpop.permute.xlu0 %1545
    %v1547 = vsel %vm844, %v1546, 0
    %1549 = vmatprep.subr.mxu0 0.0
    %1550 = vmatpush1.msra.mxu0 %v31
    %1551 = vmatprep.subr.mxu0 0.0
    %1552 = vmatpush1.msra.mxu0 %v32
    %1553 = vmatprep.subr.mxu0 0.0
    %1554 = vmatpush1.msra.mxu0 %v33
    %1555 = vmatprep.subr.mxu0 0.0
    %1556 = vmatpush1.msra.mxu0 %v34
    %1557 = vmatprep.subr.mxu0 0.0
    %1558 = vmatpush1.msra.mxu0 0.0
    %1559 = vmatprep.subr.mxu0 0.0
    %1560 = vmatpush1.msra.mxu0 0.0
    %1561 = vmatprep.subr.mxu0 0.0
    %1562 = vmatpush1.msra.mxu0 0.0
    %1563 = vmatprep.subr.mxu0 0.0
    %1564 = vmatpush1.msra.mxu0 0.0
    %1565 = vmatprep.subr.mxu0 0.0
    %1566 = vmatpush1.msra.mxu0 0.0
    %1567 = vmatprep.subr.mxu0 0.0
    %1568 = vmatpush1.msra.mxu0 0.0
    %1569 = vmatprep.subr.mxu0 0.0
    %1570 = vmatpush1.msra.mxu0 0.0
    %1571 = vmatprep.subr.mxu0 0.0
    %1572 = vmatpush1.msra.mxu0 0.0
    %1573 = vmatprep.subr.mxu0 0.0
    %1574 = vmatpush1.msra.mxu0 0.0
    %1575 = vmatprep.subr.mxu0 0.0
    %1576 = vmatpush1.msra.mxu0 0.0
    %1577 = vmatprep.subr.mxu0 0.0
    %1578 = vmatpush1.msra.mxu0 0.0
    %1579 = vmatprep.subr.mxu0 0.0
    %1580 = vmatpush1.msra.mxu0 0.0
    %1581 = vmatprep.subr.mxu0 0.0
    %1582 = vmatpush1.msra.mxu0 0.0
    %1583 = vmatprep.subr.mxu0 0.0
    %1584 = vmatpush1.msra.mxu0 0.0
    %1585 = vmatprep.subr.mxu0 0.0
    %1586 = vmatpush1.msra.mxu0 0.0
    %1587 = vmatprep.subr.mxu0 0.0
    %1588 = vmatpush1.msra.mxu0 0.0
    %1589 = vmatprep.subr.mxu0 0.0
    %1590 = vmatpush1.msra.mxu0 0.0
    %1591 = vmatprep.subr.mxu0 0.0
    %1592 = vmatpush1.msra.mxu0 0.0
    %1593 = vmatprep.subr.mxu0 0.0
    %1594 = vmatpush1.msra.mxu0 0.0
    %1595 = vmatprep.subr.mxu0 0.0
    %1596 = vmatpush1.msra.mxu0 0.0
    %1597 = vmatprep.subr.mxu0 0.0
    %1598 = vmatpush1.msra.mxu0 0.0
    %1599 = vmatprep.subr.mxu0 0.0
    %1600 = vmatpush1.msra.mxu0 0.0
    %1601 = vmatprep.subr.mxu0 0.0
    %1602 = vmatpush1.msra.mxu0 0.0
    %1603 = vmatprep.subr.mxu0 0.0
    %1604 = vmatpush1.msra.mxu0 0.0
    %1605 = vmatprep.subr.mxu0 0.0
    %1606 = vmatpush1.msra.mxu0 0.0
    %1607 = vmatprep.subr.mxu0 0.0
    %1608 = vmatpush1.msra.mxu0 0.0
    %1609 = vmatprep.subr.mxu0 0.0
    %1610 = vmatpush1.msra.mxu0 0.0
    %1611 = vmatprep.subr.mxu0 0.0
    %1612 = vmatpush1.msra.mxu0 0.0
    %1613 = vmatprep.mubr.f32.mxu0 0.0
    %1614 = vmatmul.mubr.f32.gmra.mrb[0].mxu0 %v1547
    %v1615 = vpop.f32.mrb[0].mxu0
    %v1616 = vadd.f32 %v855, %v1615
    %v1617 = vpop.f32.mrb[0].mxu0
    %1618 = vdwg.mxu0
    %v1620 = vrot.slane %v1616, 2
    %v1622 = vadd.f32 %v1542, %v1620
    %v1623 = vxor.u32 %v1622, 2147483648
    %v1624 = vmul.f32 %v1623, 1.442695
    %v1625 = vpow.pop %v1624
    %v1626 = vadd.f32 %v1625, 1.0
    %v1627 = vrcp.pop %v1626
    %v1628 = vmul.f32 1.0, %v1627
    %1629 = vrot.lane.b32.xlu0 %v1620, 64
    %v1630 = vpop.permute.xlu0 %1629
    %v1632 = vmul.f32 %v1628, %v1630
    %1634 = vrot.lane.b32.xlu0 %v1632, 64
    %v1635 = vpop.permute.xlu0 %1634
    %v1637 = vadd.f32 %v1542, %v1635
    %v1638 = vtanh.pop %v1637
    %v1639 = vsub.f32 1.0, %v1628
    %1641 = vrot.lane.b32.xlu0 %v1638, 96
    %v1642 = vpop.permute.xlu0 %1641
    %v1644 = vmul.f32 %v1639, %v1642
    %v1645 = vrot.slane %v1533, 7
    %v1647 = vmul.f32 %v1628, %v1645
    %v1648 = vadd.f32 %v1644, %v1647
    %v1653 = vsel %vm842, %v825, %v1190
    %v1654 = vsel %vm842, %v835, %v830
    %v1655 = vsel %vm844, %v1653, %v825
    %v1656 = vsel %vm844, %v1654, %v835
    %v1657 = vsel %vm846, %v1655, %v1190
    %v1658 = vsel %vm846, %v1656, %v830
    %v1659 = vsel %vm848, %v1657, %v825
    %v1660 = vsel %vm848, %v1658, %v835
    %v1661 = vsel %vm850, %v1659, %v1190
    %v1662 = vsel %vm850, %v1660, %v830
    %v1664 = vrot.slane %v1648, 6
    %1665 = vrot.lane.b32.xlu0 %v1664, 96
    %v1666 = vpop.permute.xlu0 %1665
    %v1667 = vsel %vm844, %v1666, 0
    %1669 = vmatprep.subr.mxu0 0.0
    %1670 = vmatpush1.msra.mxu0 %v31
    %1671 = vmatprep.subr.mxu0 0.0
    %1672 = vmatpush1.msra.mxu0 %v32
    %1673 = vmatprep.subr.mxu0 0.0
    %1674 = vmatpush1.msra.mxu0 %v33
    %1675 = vmatprep.subr.mxu0 0.0
    %1676 = vmatpush1.msra.mxu0 %v34
    %1677 = vmatprep.subr.mxu0 0.0
    %1678 = vmatpush1.msra.mxu0 0.0
    %1679 = vmatprep.subr.mxu0 0.0
    %1680 = vmatpush1.msra.mxu0 0.0
    %1681 = vmatprep.subr.mxu0 0.0
    %1682 = vmatpush1.msra.mxu0 0.0
    %1683 = vmatprep.subr.mxu0 0.0
    %1684 = vmatpush1.msra.mxu0 0.0
    %1685 = vmatprep.subr.mxu0 0.0
    %1686 = vmatpush1.msra.mxu0 0.0
    %1687 = vmatprep.subr.mxu0 0.0
    %1688 = vmatpush1.msra.mxu0 0.0
    %1689 = vmatprep.subr.mxu0 0.0
    %1690 = vmatpush1.msra.mxu0 0.0
    %1691 = vmatprep.subr.mxu0 0.0
    %1692 = vmatpush1.msra.mxu0 0.0
    %1693 = vmatprep.subr.mxu0 0.0
    %1694 = vmatpush1.msra.mxu0 0.0
    %1695 = vmatprep.subr.mxu0 0.0
    %1696 = vmatpush1.msra.mxu0 0.0
    %1697 = vmatprep.subr.mxu0 0.0
    %1698 = vmatpush1.msra.mxu0 0.0
    %1699 = vmatprep.subr.mxu0 0.0
    %1700 = vmatpush1.msra.mxu0 0.0
    %1701 = vmatprep.subr.mxu0 0.0
    %1702 = vmatpush1.msra.mxu0 0.0
    %1703 = vmatprep.subr.mxu0 0.0
    %1704 = vmatpush1.msra.mxu0 0.0
    %1705 = vmatprep.subr.mxu0 0.0
    %1706 = vmatpush1.msra.mxu0 0.0
    %1707 = vmatprep.subr.mxu0 0.0
    %1708 = vmatpush1.msra.mxu0 0.0
    %1709 = vmatprep.subr.mxu0 0.0
    %1710 = vmatpush1.msra.mxu0 0.0
    %1711 = vmatprep.subr.mxu0 0.0
    %1712 = vmatpush1.msra.mxu0 0.0
    %1713 = vmatprep.subr.mxu0 0.0
    %1714 = vmatpush1.msra.mxu0 0.0
    %1715 = vmatprep.subr.mxu0 0.0
    %1716 = vmatpush1.msra.mxu0 0.0
    %1717 = vmatprep.subr.mxu0 0.0
    %1718 = vmatpush1.msra.mxu0 0.0
    %1719 = vmatprep.subr.mxu0 0.0
    %1720 = vmatpush1.msra.mxu0 0.0
    %1721 = vmatprep.subr.mxu0 0.0
    %1722 = vmatpush1.msra.mxu0 0.0
    %1723 = vmatprep.subr.mxu0 0.0
    %1724 = vmatpush1.msra.mxu0 0.0
    %1725 = vmatprep.subr.mxu0 0.0
    %1726 = vmatpush1.msra.mxu0 0.0
    %1727 = vmatprep.subr.mxu0 0.0
    %1728 = vmatpush1.msra.mxu0 0.0
    %1729 = vmatprep.subr.mxu0 0.0
    %1730 = vmatpush1.msra.mxu0 0.0
    %1731 = vmatprep.subr.mxu0 0.0
    %1732 = vmatpush1.msra.mxu0 0.0
    %1733 = vmatprep.mubr.f32.mxu0 0.0
    %1734 = vmatmul.mubr.f32.gmra.mrb[0].mxu0 %v1667
    %v1735 = vpop.f32.mrb[0].mxu0
    %v1736 = vadd.f32 %v855, %v1735
    %v1737 = vpop.f32.mrb[0].mxu0
    %1738 = vdwg.mxu0
    %v1740 = vrot.slane %v1736, 1
    %v1742 = vadd.f32 %v1661, %v1740
    %v1743 = vadd.f32 %v1662, %v1740
    %v1744 = vxor.u32 %v1742, 2147483648
    %v1745 = vxor.u32 %v1743, 2147483648
    %v1746 = vmul.f32 %v1744, 1.442695
    %v1747 = vpow.pop %v1746
    %v1748 = vmul.f32 %v1745, 1.442695
    %v1749 = vpow.pop %v1748
    %v1750 = vadd.f32 %v1747, 1.0
    %v1751 = vadd.f32 %v1749, 1.0
    %v1752 = vrcp.pop %v1750
    %v1753 = vmul.f32 1.0, %v1752
    %v1754 = vrcp.pop %v1751
    %v1755 = vmul.f32 1.0, %v1754
    %1756 = vrot.lane.b32.xlu0 %v1740, 64
    %v1757 = vpop.permute.xlu0 %1756
    %v1759 = vmul.f32 %v1753, %v1757
    %v1760 = vmul.f32 %v1755, %v1757
    %1763 = vrot.lane.b32.xlu0 %v1759, 64
    %v1764 = vpop.permute.xlu0 %1763
    %1765 = vrot.lane.b32.xlu0 %v1760, 64
    %v1766 = vpop.permute.xlu0 %1765
    %v1769 = vadd.f32 %v1661, %v1764
    %v1770 = vadd.f32 %v1662, %v1766
    %v1771 = vtanh.pop %v1769
    %v1772 = vtanh.pop %v1770
    %v1773 = vsub.f32 1.0, %v1753
    %v1774 = vsub.f32 1.0, %v1755
    %1777 = vrot.lane.b32.xlu0 %v1771, 96
    %v1778 = vpop.permute.xlu0 %1777
    %1779 = vrot.lane.b32.xlu0 %v1772, 96
    %v1780 = vpop.permute.xlu0 %1779
    %v1783 = vmul.f32 %v1773, %v1778
    %v1784 = vmul.f32 %v1774, %v1780
    %v1785 = vrot.slane %v1648, 7
    %v1787 = vmul.f32 %v1753, %v1785
    %v1788 = vmul.f32 %v1755, %v1785
    %v1789 = vadd.f32 %v1783, %v1787
    %v1790 = vadd.f32 %v1784, %v1788
    %vm1794 = vcmask 1040384
    %v1795 = vrot.slane %v1789, 7
    %v1796 = vrot.slane %v1790, 7
    %v1797 = vsel %vm1794, %v1795, %v1796
    %1798 = vrot.lane.b32.xlu0 %v1797, 96
    %v1799 = vpop.permute.xlu0 %1798
    %v1801 = vsel %vm842, %v968, %v1799
    %1802 = vrot.lane.b32.xlu0 %v1070, 96
    %v1803 = vpop.permute.xlu0 %1802
    %v1805 = vrot.slane %v1648, 5
    %1806 = vrot.lane.b32.xlu0 %v1805, 96
    %v1807 = vpop.permute.xlu0 %1806
    %v1809 = vsel %vm842, %v1803, %v1807
    %1810 = vrot.lane.b32.xlu0 %v1187, 96
    %v1811 = vpop.permute.xlu0 %1810
    %v1813 = vrot.slane %v1533, 3
    %1814 = vrot.lane.b32.xlu0 %v1813, 96
    %v1815 = vpop.permute.xlu0 %1814
    %v1817 = vsel %vm842, %v1811, %v1815
    %1818 = vrot.lane.b32.xlu0 %v1303, 96
    %v1819 = vpop.permute.xlu0 %1818
    %v1821 = vrot.slane %v1418, 1
    %1822 = vrot.lane.b32.xlu0 %v1821, 96
    %v1823 = vpop.permute.xlu0 %1822
    %v1825 = vsel %vm842, %v1819, %v1823
    %1826 = vrot.lane.b32.xlu0 %v1418, 96
    %v1827 = vpop.permute.xlu0 %1826
    %1829 = vrot.lane.b32.xlu0 %v1415, 96
    %v1830 = vpop.permute.xlu0 %1829
    %v1832 = vsel %vm842, %v1827, %v1830
    %1833 = vrot.lane.b32.xlu0 %v1533, 96
    %v1834 = vpop.permute.xlu0 %1833
    %v1836 = vrot.slane %v1187, 5
    %1837 = vrot.lane.b32.xlu0 %v1836, 96
    %v1838 = vpop.permute.xlu0 %1837
    %v1840 = vsel %vm842, %v1834, %v1838
    %1841 = vrot.lane.b32.xlu0 %v1648, 96
    %v1842 = vpop.permute.xlu0 %1841
    %v1844 = vrot.slane %v1070, 3
    %1845 = vrot.lane.b32.xlu0 %v1844, 96
    %v1846 = vpop.permute.xlu0 %1845
    %v1848 = vsel %vm842, %v1842, %v1846
    %1849 = vrot.lane.b32.xlu0 %v1789, 96
    %v1850 = vpop.permute.xlu0 %1849
    %1851 = vrot.lane.b32.xlu0 %v1790, 96
    %v1852 = vpop.permute.xlu0 %1851
    %v1855 = vrot.slane %v954, 1
    %1856 = vrot.lane.b32.xlu0 %v1855, 96
    %v1857 = vpop.permute.xlu0 %1856
    %v1859 = vsel %vm842, %v1850, %v1857
    %v1860 = vsel %vm842, %v1852, %v1857
    %v1862 = vrot.slane %v1809, 1
    %v1865 = vrot.slane %v1817, 2
    %v1868 = vrot.slane %v1825, 3
    %v1871 = vrot.slane %v1832, 4
    %v1874 = vrot.slane %v1840, 5
    %v1877 = vrot.slane %v1848, 6
    %v1881 = vrot.slane %v1859, 7
    %v1882 = vrot.slane %v1860, 7
    %v1883 = vsel %vm1794, %v1881, %v1882
    %vm1885 = vcmask 254976
    %v1886 = vsel %vm1885, %v1801, 0.0
    %1887 = vadd.xlane.f32.xlu0 %v1886
    %v1888 = vpop.xlane.xlu0 %1887
    %v1889 = vsel %vm1885, %v1862, 0.0
    %1890 = vadd.xlane.f32.xlu0 %v1889
    %v1891 = vpop.xlane.xlu0 %1890
    %v1892 = vsel %vm1885, %v1865, 0.0
    %1893 = vadd.xlane.f32.xlu0 %v1892
    %v1894 = vpop.xlane.xlu0 %1893
    %v1895 = vsel %vm1885, %v1868, 0.0
    %1896 = vadd.xlane.f32.xlu0 %v1895
    %v1897 = vpop.xlane.xlu0 %1896
    %v1898 = vsel %vm1885, %v1871, 0.0
    %1899 = vadd.xlane.f32.xlu0 %v1898
    %v1900 = vpop.xlane.xlu0 %1899
    %v1901 = vsel %vm1885, %v1874, 0.0
    %1902 = vadd.xlane.f32.xlu0 %v1901
    %v1903 = vpop.xlane.xlu0 %1902
    %v1904 = vsel %vm1885, %v1877, 0.0
    %1905 = vadd.xlane.f32.xlu0 %v1904
    %v1906 = vpop.xlane.xlu0 %1905
    %v1907 = vsel %vm1885, %v1883, 0.0
    %1908 = vadd.xlane.f32.xlu0 %v1907
    %v1909 = vpop.xlane.xlu0 %1908
    %vm1910 = vcmask 1041408
    %v1911 = vsel %vm1910, %v1888, 0.0
    %v1912 = vrot.slane %v1911, 4
    %v1913 = vadd.f32 %v1911, %v1912
    %v1914 = vrot.slane %v1913, 2
    %v1915 = vadd.f32 %v1913, %v1914
    %v1916 = vrot.slane %v1915, 1
    %v1917 = vadd.f32 %v1915, %v1916
    %v1918 = vsel %vm1910, %v1891, 0.0
    %v1919 = vrot.slane %v1918, 4
    %v1920 = vadd.f32 %v1918, %v1919
    %v1921 = vrot.slane %v1920, 2
    %v1922 = vadd.f32 %v1920, %v1921
    %v1923 = vrot.slane %v1922, 1
    %v1924 = vadd.f32 %v1922, %v1923
    %v1925 = vsel %vm1910, %v1894, 0.0
    %v1926 = vrot.slane %v1925, 4
    %v1927 = vadd.f32 %v1925, %v1926
    %v1928 = vrot.slane %v1927, 2
    %v1929 = vadd.f32 %v1927, %v1928
    %v1930 = vrot.slane %v1929, 1
    %v1931 = vadd.f32 %v1929, %v1930
    %v1932 = vsel %vm1910, %v1897, 0.0
    %v1933 = vrot.slane %v1932, 4
    %v1934 = vadd.f32 %v1932, %v1933
    %v1935 = vrot.slane %v1934, 2
    %v1936 = vadd.f32 %v1934, %v1935
    %v1937 = vrot.slane %v1936, 1
    %v1938 = vadd.f32 %v1936, %v1937
    %v1939 = vsel %vm1910, %v1900, 0.0
    %v1940 = vrot.slane %v1939, 4
    %v1941 = vadd.f32 %v1939, %v1940
    %v1942 = vrot.slane %v1941, 2
    %v1943 = vadd.f32 %v1941, %v1942
    %v1944 = vrot.slane %v1943, 1
    %v1945 = vadd.f32 %v1943, %v1944
    %v1946 = vsel %vm1910, %v1903, 0.0
    %v1947 = vrot.slane %v1946, 4
    %v1948 = vadd.f32 %v1946, %v1947
    %v1949 = vrot.slane %v1948, 2
    %v1950 = vadd.f32 %v1948, %v1949
    %v1951 = vrot.slane %v1950, 1
    %v1952 = vadd.f32 %v1950, %v1951
    %v1953 = vsel %vm1910, %v1906, 0.0
    %v1954 = vrot.slane %v1953, 4
    %v1955 = vadd.f32 %v1953, %v1954
    %v1956 = vrot.slane %v1955, 2
    %v1957 = vadd.f32 %v1955, %v1956
    %v1958 = vrot.slane %v1957, 1
    %v1959 = vadd.f32 %v1957, %v1958
    %v1960 = vsel %vm1910, %v1909, 0.0
    %v1961 = vrot.slane %v1960, 4
    %v1962 = vadd.f32 %v1960, %v1961
    %v1963 = vrot.slane %v1962, 2
    %v1964 = vadd.f32 %v1962, %v1963
    %v1965 = vrot.slane %v1964, 1
    %v1966 = vadd.f32 %v1964, %v1965
    %v1967 = vmul.f32 %v1917, 0.015625
    %v1968 = vmul.f32 %v1924, 0.015625
    %v1969 = vmul.f32 %v1931, 0.015625
    %v1970 = vmul.f32 %v1938, 0.015625
    %v1971 = vmul.f32 %v1945, 0.015625
    %v1972 = vmul.f32 %v1952, 0.015625
    %v1973 = vmul.f32 %v1959, 0.015625
    %v1974 = vmul.f32 %v1966, 0.015625
    %v1975 = vsub.f32 %v1801, %v1967
    %v1976 = vsub.f32 %v1862, %v1968
    %v1977 = vsub.f32 %v1865, %v1969
    %v1978 = vsub.f32 %v1868, %v1970
    %v1979 = vsub.f32 %v1871, %v1971
    %v1980 = vsub.f32 %v1874, %v1972
    %v1981 = vsub.f32 %v1877, %v1973
    %v1982 = vsub.f32 %v1883, %v1974
    %v1983 = vmul.f32 %v1975, %v1975
    %v1984 = vmul.f32 %v1976, %v1976
    %v1985 = vmul.f32 %v1977, %v1977
    %v1986 = vmul.f32 %v1978, %v1978
    %v1987 = vmul.f32 %v1979, %v1979
    %v1988 = vmul.f32 %v1980, %v1980
    %v1989 = vmul.f32 %v1981, %v1981
    %v1990 = vmul.f32 %v1982, %v1982
    %v1991 = vsel %vm1885, %v1983, 0.0
    %1992 = vadd.xlane.f32.xlu0 %v1991
    %v1993 = vpop.xlane.xlu0 %1992
    %v1994 = vsel %vm1885, %v1984, 0.0
    %1995 = vadd.xlane.f32.xlu0 %v1994
    %v1996 = vpop.xlane.xlu0 %1995
    %v1997 = vsel %vm1885, %v1985, 0.0
    %1998 = vadd.xlane.f32.xlu0 %v1997
    %v1999 = vpop.xlane.xlu0 %1998
    %v2000 = vsel %vm1885, %v1986, 0.0
    %2001 = vadd.xlane.f32.xlu0 %v2000
    %v2002 = vpop.xlane.xlu0 %2001
    %v2003 = vsel %vm1885, %v1987, 0.0
    %2004 = vadd.xlane.f32.xlu0 %v2003
    %v2005 = vpop.xlane.xlu0 %2004
    %v2006 = vsel %vm1885, %v1988, 0.0
    %2007 = vadd.xlane.f32.xlu0 %v2006
    %v2008 = vpop.xlane.xlu0 %2007
    %v2009 = vsel %vm1885, %v1989, 0.0
    %2010 = vadd.xlane.f32.xlu0 %v2009
    %v2011 = vpop.xlane.xlu0 %2010
    %v2012 = vsel %vm1885, %v1990, 0.0
    %2013 = vadd.xlane.f32.xlu0 %v2012
    %v2014 = vpop.xlane.xlu0 %2013
    %v2015 = vsel %vm1910, %v1993, 0.0
    %v2016 = vrot.slane %v2015, 4
    %v2017 = vadd.f32 %v2015, %v2016
    %v2018 = vrot.slane %v2017, 2
    %v2019 = vadd.f32 %v2017, %v2018
    %v2020 = vrot.slane %v2019, 1
    %v2021 = vadd.f32 %v2019, %v2020
    %v2022 = vsel %vm1910, %v1996, 0.0
    %v2023 = vrot.slane %v2022, 4
    %v2024 = vadd.f32 %v2022, %v2023
    %v2025 = vrot.slane %v2024, 2
    %v2026 = vadd.f32 %v2024, %v2025
    %v2027 = vrot.slane %v2026, 1
    %v2028 = vadd.f32 %v2026, %v2027
    %v2029 = vsel %vm1910, %v1999, 0.0
    %v2030 = vrot.slane %v2029, 4
    %v2031 = vadd.f32 %v2029, %v2030
    %v2032 = vrot.slane %v2031, 2
    %v2033 = vadd.f32 %v2031, %v2032
    %v2034 = vrot.slane %v2033, 1
    %v2035 = vadd.f32 %v2033, %v2034
    %v2036 = vsel %vm1910, %v2002, 0.0
    %v2037 = vrot.slane %v2036, 4
    %v2038 = vadd.f32 %v2036, %v2037
    %v2039 = vrot.slane %v2038, 2
    %v2040 = vadd.f32 %v2038, %v2039
    %v2041 = vrot.slane %v2040, 1
    %v2042 = vadd.f32 %v2040, %v2041
    %v2043 = vsel %vm1910, %v2005, 0.0
    %v2044 = vrot.slane %v2043, 4
    %v2045 = vadd.f32 %v2043, %v2044
    %v2046 = vrot.slane %v2045, 2
    %v2047 = vadd.f32 %v2045, %v2046
    %v2048 = vrot.slane %v2047, 1
    %v2049 = vadd.f32 %v2047, %v2048
    %v2050 = vsel %vm1910, %v2008, 0.0
    %v2051 = vrot.slane %v2050, 4
    %v2052 = vadd.f32 %v2050, %v2051
    %v2053 = vrot.slane %v2052, 2
    %v2054 = vadd.f32 %v2052, %v2053
    %v2055 = vrot.slane %v2054, 1
    %v2056 = vadd.f32 %v2054, %v2055
    %v2057 = vsel %vm1910, %v2011, 0.0
    %v2058 = vrot.slane %v2057, 4
    %v2059 = vadd.f32 %v2057, %v2058
    %v2060 = vrot.slane %v2059, 2
    %v2061 = vadd.f32 %v2059, %v2060
    %v2062 = vrot.slane %v2061, 1
    %v2063 = vadd.f32 %v2061, %v2062
    %v2064 = vsel %vm1910, %v2014, 0.0
    %v2065 = vrot.slane %v2064, 4
    %v2066 = vadd.f32 %v2064, %v2065
    %v2067 = vrot.slane %v2066, 2
    %v2068 = vadd.f32 %v2066, %v2067
    %v2069 = vrot.slane %v2068, 1
    %v2070 = vadd.f32 %v2068, %v2069
    %v2071 = vmul.f32 %v2021, 0.015625
    %v2072 = vmul.f32 %v2028, 0.015625
    %v2073 = vmul.f32 %v2035, 0.015625
    %v2074 = vmul.f32 %v2042, 0.015625
    %v2075 = vmul.f32 %v2049, 0.015625
    %v2076 = vmul.f32 %v2056, 0.015625
    %v2077 = vmul.f32 %v2063, 0.015625
    %v2078 = vmul.f32 %v2070, 0.015625
    %v2079 = vadd.f32 %v2071, 1e-05
    %v2080 = vadd.f32 %v2072, 1e-05
    %v2081 = vadd.f32 %v2073, 1e-05
    %v2082 = vadd.f32 %v2074, 1e-05
    %v2083 = vadd.f32 %v2075, 1e-05
    %v2084 = vadd.f32 %v2076, 1e-05
    %v2085 = vadd.f32 %v2077, 1e-05
    %v2086 = vadd.f32 %v2078, 1e-05
    %v2087 = vrsqrt.pop %v2079
    %v2088 = vrsqrt.pop %v2080
    %v2089 = vrsqrt.pop %v2081
    %v2090 = vrsqrt.pop %v2082
    %v2091 = vrsqrt.pop %v2083
    %v2092 = vrsqrt.pop %v2084
    %v2093 = vrsqrt.pop %v2085
    %v2094 = vrsqrt.pop %v2086
    %v2095 = vmul.f32 %v1975, %v2087
    %v2096 = vmul.f32 %v1976, %v2088
    %v2097 = vmul.f32 %v1977, %v2089
    %v2098 = vmul.f32 %v1978, %v2090
    %v2099 = vmul.f32 %v1979, %v2091
    %v2100 = vmul.f32 %v1980, %v2092
    %v2101 = vmul.f32 %v1981, %v2093
    %v2102 = vmul.f32 %v1982, %v2094
    %2103 = vst.msk [vmem:[%s4] sm:$0x3] %vm1885, %v2095
    %2104 = vst.msk [vmem:[%s4 + $0x2] sm:$0x3] %vm1885, %v2096
    %2105 = vst.msk [vmem:[%s4 + $0x4] sm:$0x3] %vm1885, %v2097
    %2106 = vst.msk [vmem:[%s4 + $0x6] sm:$0x3] %vm1885, %v2098
    %2107 = vst.msk [vmem:[%s4 + $0x8] sm:$0x3] %vm1885, %v2099
    %2108 = vst.msk [vmem:[%s4 + $0xa] sm:$0x3] %vm1885, %v2100
    %2109 = vst.msk [vmem:[%s4 + $0xc] sm:$0x3] %vm1885, %v2101
    %2110 = vst.msk [vmem:[%s4 + $0xe] sm:$0x3] %vm1885, %v2102
    // Predicated region
    $region22: #{stdcn_with_gru_pallas.1} parent=1 // pred_check
      _
    $region23: #{stdcn_with_gru_pallas.1} parent=1 // pred_check_branch
      %2112 = sbr.rel (0) target = $region25
    $region24: #{stdcn_with_gru_pallas.1} parent=1 // pred_region
      _
    $region25: #{stdcn_with_gru_pallas.1} parent=1 // pred_fallthru
      _
    // Predicated region
    $region26: #{stdcn_with_gru_pallas.1} parent=1 // pred_check
      _
    $region27: #{stdcn_with_gru_pallas.1} parent=1 // pred_check_branch
      %2114 = sbr.rel (0) target = $region29
    $region28: #{stdcn_with_gru_pallas.1} parent=1 // pred_region
      _
    $region29: #{stdcn_with_gru_pallas.1} parent=1 // pred_fallthru
      _
    %2115 = vsyncpa [#allocation3], 1

</llo_original>
